<compile_context>
chip_gen: v6e
topology: v6e:2x2x1
jax: 0.10.0
libtpu: 0.0.40
codegen_flags: <defaults>
</compile_context>

<pallas_src>
import jax
import jax.numpy as jnp
from jax.experimental import pallas as pl
from jax.experimental.pallas import tpu as pltpu

EPS = 1e-6


def _round_up(x, m):
    return (x + m - 1) // m * m


def _make_kernel(tn, n_tiled):
    def kernel(x_ref, w_ref, bias_ref, o_ref):
        x = x_ref[...].astype(jnp.float32)                        # (tm, D) f32
        D = x.shape[-1]

        # ---- LayerNorm core (torch semantics: unbiased std, divide by std + eps) ----
        mean = jnp.mean(x, axis=-1, keepdims=True)                # (tm, 1)
        centered = x - mean
        var_unbiased = jnp.sum(centered * centered, axis=-1, keepdims=True) * (1.0 / (D - 1))
        inv = pl.reciprocal(jnp.sqrt(var_unbiased) + EPS, approx=True)   # EUP slot
        normed = centered * inv                                   # a2/b2 folded into w/bias

        # ---- sublayer: Linear(D, D) column-slice on the MXU (bf16 ops, f32 acc) ----
        sub = jnp.dot(normed.astype(w_ref.dtype), w_ref[...],
                      preferred_element_type=jnp.float32)         # (tm, tn)
        sub = sub + bias_ref[...].astype(jnp.float32)

        # ---- dropout (eval mode = identity) + residual ----
        # Re-read x from the VMEM ref so the full-width f32 x is not kept live
        # across the reductions and the dot (cheap vld, less vreg pressure).
        if n_tiled:
            col = pl.multiple_of(pl.program_id(0) * tn, tn)
            x_res = x_ref[:, pl.ds(col, tn)].astype(jnp.float32)
        else:
            x_res = x_ref[...].astype(jnp.float32)
        o_ref[...] = (x_res + sub).astype(o_ref.dtype)

    return kernel


def fold_params(w, bias, a2, b2):
    """One-time fold of the LayerNorm affine into the Linear:
         a2*((x-m)*inv) @ w + (b2 @ w + bias)
           == ((x-m)*inv) @ (a2[:,None]*w)  +  (b2 @ w + bias)
    Cache the result when parameters are static (inference) so each forward
    call does no DxD work outside the kernel."""
    D = w.shape[0]
    a2f = jnp.reshape(a2, (D,)).astype(jnp.float32)
    b2f = jnp.reshape(b2, (1, D)).astype(jnp.float32)
    bf = jnp.reshape(bias, (1, D)).astype(jnp.float32)
    w_f32 = w.astype(jnp.float32)
    w_folded = (a2f[:, None] * w_f32).astype(jnp.bfloat16)        # bf16 MXU operand
    bias_folded = (b2f @ w_f32 + bf).astype(jnp.float32)          # (1, D) f32
    return w_folded, bias_folded


def _pick_vmem_limit():
    # ~3/4 of physical VMEM, capped at 96 MiB (v5e/v6e: 128 MiB -> 96 MiB;
    # v7x: 64 MiB -> 48 MiB).  Fallback assumes the tightest chip (v7x).
    try:
        cap = pltpu.get_tpu_info().vmem_capacity_bytes
    except Exception:
        cap = 64 * 1024 * 1024
    return int(min(96 * 1024 * 1024, cap * 3 // 4))


def _choose_tn(D):
    """Output-feature tile width.  Keep the bf16 weight resident while small;
    otherwise stream (D, tn) column tiles (tn a multiple of 128 dividing D,
    tile <= ~8 MiB so double-buffering stays <= 16 MiB)."""
    if 2 * D * D <= (8 << 20):
        return D
    max_tn = max(128, ((8 << 20) // (2 * D)) // 128 * 128)
    best = None
    for t in range(128, min(max_tn, D) + 1, 128):
        if D % t == 0:
            best = t
    # TODO(synk): D that is large but has no multiple-of-128 divisor falls back to a
    # resident weight (would need ragged N tiles + clamped residual slice).
    return best if best is not None else D


def sublayer_connection(x, w_folded, bias_folded, *, tile_rows=512,
                        single_buffer_consts=True):
    """x: (..., D).  w_folded: (D, D) (bf16, from fold_params).  bias_folded: (1, D) f32.
    Output dtype follows x.dtype (pass bf16 activations to halve HBM traffic)."""
    orig_shape = x.shape
    D = orig_shape[-1]
    x2 = x.reshape(-1, D)
    rows = x2.shape[0]

    tn = _choose_tn(D)
    num_n = pl.cdiv(D, tn)
    n_tiled = num_n > 1

    vmem_limit = _pick_vmem_limit()
    x_bytes = x2.dtype.itemsize

    # Row tile: big by default, clamped to the row count, rounded to the sublane (8).
    tm = min(int(tile_rows), max(8, _round_up(rows, 8)))
    tm = _round_up(tm, 8)

    # Back off the row tile if the (conservative, double-buffered) working set
    # would not fit comfortably under the VMEM limit.
    def vmem_est(tm_):
        return (2 * tm_ * D * x_bytes            # x tile (double-buffered)
                + 2 * tm_ * tn * x_bytes         # out tile
                + 2 * D * tn * 2                 # bf16 weight tile (conservative x2)
                + 2 * tn * 4)                    # bias tile
    while tm > 8 and vmem_est(tm) > (vmem_limit * 4) // 5:
        tm = max(8, _round_up(tm // 2, 8))

    num_m = pl.cdiv(rows, tm)                    # ragged tail masked by Pallas (no pad)

    def const_spec(shape, index_map):
        # Truly constant blocks (single N tile): single-buffer -> no wasted VMEM.
        if single_buffer_consts and not n_tiled:
            return pl.BlockSpec(shape, index_map, pipeline_mode=pl.Buffered(1))
        return pl.BlockSpec(shape, index_map)

    out_bytes = x_bytes                          # output dtype follows x.dtype
    cost = pl.CostEstimate(
        flops=2 * rows * D * D + 8 * rows * D,
        transcendentals=2 * rows,
        bytes_accessed=(num_n * rows * D * x_bytes     # x (re-read once per N tile)
                        + rows * D * out_bytes         # out
                        + D * D * 2 + D * 4),          # weight (bf16) + bias
    )

    kernel = _make_kernel(tn, n_tiled)

    out = pl.pallas_call(
        kernel,
        out_shape=jax.ShapeDtypeStruct((rows, D), x.dtype),
        grid_spec=pltpu.PrefetchScalarGridSpec(
            num_scalar_prefetch=0,
            grid=(num_n, num_m),                                   # rows innermost
            in_specs=[
                pl.BlockSpec((tm, D), lambda j, i: (i, 0)),        # x tile (lane-dense, D last)
                const_spec((D, tn), lambda j, i: (0, j)),          # folded weight (bf16)
                const_spec((1, tn), lambda j, i: (0, j)),          # folded bias (f32)
            ],
            out_specs=pl.BlockSpec((tm, tn), lambda j, i: (i, j)),
        ),
        compiler_params=pltpu.CompilerParams(
            dimension_semantics=("arbitrary", "parallel"),
            vmem_limit_bytes=vmem_limit,
        ),
        cost_estimate=cost,
    )(x2, w_folded, bias_folded)

    return out.reshape(orig_shape)


def reference(x, w, bias, a2, b2):
    """Pure-JAX f32 reference mirroring the PyTorch forward."""
    x = x.astype(jnp.float32)
    D = x.shape[-1]
    mean = jnp.mean(x, axis=-1, keepdims=True)
    centered = x - mean
    std = jnp.sqrt(jnp.sum(centered ** 2, axis=-1, keepdims=True) / (D - 1))
    normed = jnp.reshape(a2, (D,)) * centered / (std + EPS) + jnp.reshape(b2, (D,))
    sub = normed @ w + jnp.reshape(bias, (D,))
    return x + sub


if __name__ == "__main__":
    key = jax.random.PRNGKey(0)
    batch, seq, hidden = 2, 96, 128              # rows = 192

    kx, kw, kb = jax.random.split(key, 3)
    x = jax.random.normal(kx, (batch, seq, hidden), dtype=jnp.float32)
    # Deterministic sublayer (Linear) params:
    w = jax.random.normal(kw, (hidden, hidden), dtype=jnp.float32) * 0.02
    bias = jax.random.normal(kb, (hidden,), dtype=jnp.float32) * 0.01
    # LayerNorm params per the module __init__: ones / zeros.
    a2 = jnp.ones((hidden,), dtype=jnp.float32)
    b2 = jnp.zeros((hidden,), dtype=jnp.float32)

    # Fold LN affine into the linear once (cacheable across forward calls).
    w_folded, bias_folded = fold_params(w, bias, a2, b2)

    def run(**kwargs):
        try:
            return jax.block_until_ready(
                sublayer_connection(x, w_folded, bias_folded, **kwargs))
        except Exception:
            # Fallback if this JAX build rejects pipeline_mode=pl.Buffered(1) on the
            # top-level grid.  This double-buffers the resident weight; only relevant
            # when the weight is small (large D takes the N-tiled path instead).
            return jax.block_until_ready(
                sublayer_connection(x, w_folded, bias_folded,
                                    single_buffer_consts=False, **kwargs))

    ref = reference(x, w, bias, a2, b2)

    out = run()                                  # single 192-row tile (no masking)
    assert out.shape == (batch, seq, hidden)
    # Tolerance accounts for bf16 MXU operands + approx reciprocal vs f32 reference.
    assert jnp.allclose(out, ref, atol=3e-2, rtol=3e-2), "mismatch vs reference"

    out_ragged = run(tile_rows=128)              # 2 row tiles, ragged masked tail
    assert jnp.allclose(out_ragged, ref, atol=3e-2, rtol=3e-2), "ragged-tile mismatch"

    print("KERNEL_OK")
</pallas_src>

<mosaic_0001>
module attributes {stable_mosaic.version = 11 : i64} {
  func.func @kernel(%arg0: i32, %arg1: i32, %arg2: memref<192x128xf32, #tpu.memory_space<vmem>>, %arg3: memref<128x128xbf16, #tpu.memory_space<vmem>>, %arg4: memref<1x128xf32, #tpu.memory_space<vmem>>, %arg5: memref<192x128xf32, #tpu.memory_space<vmem>>) attributes {dimension_semantics = [#tpu.dimension_semantics<arbitrary>, #tpu.dimension_semantics<parallel>], iteration_bounds = array<i64: 1, 1>, scalar_prefetch = 0 : i64, scratch_operands = 0 : i64, tpu.core_type = #tpu.core_type<tc>, window_params = [{transform_indices = @transform_0, window_bounds = array<i64: 192, 128>}, {pipeline_mode = #tpu.pipeline_mode<synchronous>, transform_indices = @transform_1, window_bounds = array<i64: 128, 128>}, {pipeline_mode = #tpu.pipeline_mode<synchronous>, transform_indices = @transform_2, window_bounds = array<i64: 1, 128>}, {transform_indices = @transform_3, window_bounds = array<i64: 192, 128>}]} {
    %c0 = arith.constant 0 : index
    %c0_0 = arith.constant 0 : index
    %0 = vector.load %arg2[%c0, %c0_0] : memref<192x128xf32, #tpu.memory_space<vmem>>, vector<192x128xf32>
    %cst = arith.constant dense<0.000000e+00> : vector<192xf32>
    %1 = vector.multi_reduction <add>, %0, %cst [1] : vector<192x128xf32> to vector<192xf32>
    %2 = vector.shape_cast %1 : vector<192xf32> to vector<192x1xf32>
    %cst_1 = arith.constant 1.280000e+02 : f32
    %3 = vector.broadcast %cst_1 : f32 to vector<192x1xf32>
    %4 = arith.divf %2, %3 : vector<192x1xf32>
    %5 = vector.broadcast %4 : vector<192x1xf32> to vector<192x128xf32>
    %6 = arith.subf %0, %5 : vector<192x128xf32>
    %7 = arith.mulf %6, %6 : vector<192x128xf32>
    %cst_2 = arith.constant dense<0.000000e+00> : vector<192xf32>
    %8 = vector.multi_reduction <add>, %7, %cst_2 [1] : vector<192x128xf32> to vector<192xf32>
    %9 = vector.shape_cast %8 : vector<192xf32> to vector<192x1xf32>
    %cst_3 = arith.constant 0.00787401571 : f32
    %10 = vector.broadcast %cst_3 : f32 to vector<192x1xf32>
    %11 = arith.mulf %9, %10 : vector<192x1xf32>
    %12 = math.sqrt %11 : vector<192x1xf32>
    %cst_4 = arith.constant 9.99999997E-7 : f32
    %13 = vector.broadcast %cst_4 : f32 to vector<192x1xf32>
    %14 = arith.addf %12, %13 : vector<192x1xf32>
    %15 = tpu.reciprocal %14 {approx = true} : vector<192x1xf32> -> vector<192x1xf32>
    %16 = vector.broadcast %15 : vector<192x1xf32> to vector<192x128xf32>
    %17 = arith.mulf %6, %16 : vector<192x128xf32>
    %18 = arith.truncf %17 : vector<192x128xf32> to vector<192x128xbf16>
    %c0_5 = arith.constant 0 : index
    %c0_6 = arith.constant 0 : index
    %19 = vector.load %arg3[%c0_5, %c0_6] : memref<128x128xbf16, #tpu.memory_space<vmem>>, vector<128x128xbf16>
    %cst_7 = arith.constant dense<0.000000e+00> : vector<192x128xf32>
    %20 = tpu.matmul %18, %19, %cst_7 {dimension_numbers = #tpu.dot_dimension_numbers<[1], [0], [0], [1], [0, 0, 1, 1], [], []>} : vector<192x128xbf16>, vector<128x128xbf16>, vector<192x128xf32> -> vector<192x128xf32>
    %c0_8 = arith.constant 0 : index
    %c0_9 = arith.constant 0 : index
    %21 = vector.load %arg4[%c0_8, %c0_9] : memref<1x128xf32, #tpu.memory_space<vmem>>, vector<1x128xf32>
    %22 = vector.broadcast %21 : vector<1x128xf32> to vector<192x128xf32>
    %23 = arith.addf %20, %22 : vector<192x128xf32>
    %c0_10 = arith.constant 0 : index
    %c0_11 = arith.constant 0 : index
    %24 = vector.load %arg2[%c0_10, %c0_11] : memref<192x128xf32, #tpu.memory_space<vmem>>, vector<192x128xf32>
    %25 = arith.addf %24, %23 : vector<192x128xf32>
    %c0_12 = arith.constant 0 : index
    %c0_13 = arith.constant 0 : index
    %26 = vector.load %arg5[%c0_12, %c0_13] : memref<192x128xf32, #tpu.memory_space<vmem>>, vector<192x128xf32>
    tpu.vector_store %arg5[%c0_12, %c0_13], %25 {strides = array<i32>} : memref<192x128xf32, #tpu.memory_space<vmem>>, vector<192x128xf32>,
    return
  }
  func.func @transform_0(%arg0: i32, %arg1: i32) -> (i32, i32) {
    %c0_i32 = arith.constant 0 : i32
    %c0_i32_0 = arith.constant 0 : i32
    return %arg1, %c0_i32 : i32, i32
  }
  func.func @transform_1(%arg0: i32, %arg1: i32) -> (i32, i32) {
    %c0_i32 = arith.constant 0 : i32
    %c0_i32_0 = arith.constant 0 : i32
    return %c0_i32, %arg0 : i32, i32
  }
  func.func @transform_2(%arg0: i32, %arg1: i32) -> (i32, i32) {
    %c0_i32 = arith.constant 0 : i32
    %c0_i32_0 = arith.constant 0 : i32
    return %c0_i32, %arg0 : i32, i32
  }
  func.func @transform_3(%arg0: i32, %arg1: i32) -> (i32, i32) {
    %c0_i32 = arith.constant 0 : i32
    return %arg1, %arg0 : i32, i32
  }
}

module attributes {stable_mosaic.version = 11 : i64} {
  func.func @kernel(%arg0: i32, %arg1: i32, %arg2: memref<192x128xf32, #tpu.memory_space<vmem>>, %arg3: memref<128x128xbf16, #tpu.memory_space<vmem>>, %arg4: memref<1x128xf32, #tpu.memory_space<vmem>>, %arg5: memref<192x128xf32, #tpu.memory_space<vmem>>) attributes {dimension_semantics = [#tpu.dimension_semantics<arbitrary>, #tpu.dimension_semantics<parallel>], iteration_bounds = array<i64: 1, 1>, scalar_prefetch = 0 : i64, scratch_operands = 0 : i64, tpu.core_type = #tpu.core_type<tc>, window_params = [{transform_indices = @transform_0, window_bounds = array<i64: 192, 128>}, {transform_indices = @transform_1, window_bounds = array<i64: 128, 128>}, {transform_indices = @transform_2, window_bounds = array<i64: 1, 128>}, {transform_indices = @transform_3, window_bounds = array<i64: 192, 128>}]} {
    %c0 = arith.constant 0 : index
    %c0_0 = arith.constant 0 : index
    %0 = vector.load %arg2[%c0, %c0_0] : memref<192x128xf32, #tpu.memory_space<vmem>>, vector<192x128xf32>
    %cst = arith.constant dense<0.000000e+00> : vector<192xf32>
    %1 = vector.multi_reduction <add>, %0, %cst [1] : vector<192x128xf32> to vector<192xf32>
    %2 = vector.shape_cast %1 : vector<192xf32> to vector<192x1xf32>
    %cst_1 = arith.constant 1.280000e+02 : f32
    %3 = vector.broadcast %cst_1 : f32 to vector<192x1xf32>
    %4 = arith.divf %2, %3 : vector<192x1xf32>
    %5 = vector.broadcast %4 : vector<192x1xf32> to vector<192x128xf32>
    %6 = arith.subf %0, %5 : vector<192x128xf32>
    %7 = arith.mulf %6, %6 : vector<192x128xf32>
    %cst_2 = arith.constant dense<0.000000e+00> : vector<192xf32>
    %8 = vector.multi_reduction <add>, %7, %cst_2 [1] : vector<192x128xf32> to vector<192xf32>
    %9 = vector.shape_cast %8 : vector<192xf32> to vector<192x1xf32>
    %cst_3 = arith.constant 0.00787401571 : f32
    %10 = vector.broadcast %cst_3 : f32 to vector<192x1xf32>
    %11 = arith.mulf %9, %10 : vector<192x1xf32>
    %12 = math.sqrt %11 : vector<192x1xf32>
    %cst_4 = arith.constant 9.99999997E-7 : f32
    %13 = vector.broadcast %cst_4 : f32 to vector<192x1xf32>
    %14 = arith.addf %12, %13 : vector<192x1xf32>
    %15 = tpu.reciprocal %14 {approx = true} : vector<192x1xf32> -> vector<192x1xf32>
    %16 = vector.broadcast %15 : vector<192x1xf32> to vector<192x128xf32>
    %17 = arith.mulf %6, %16 : vector<192x128xf32>
    %18 = arith.truncf %17 : vector<192x128xf32> to vector<192x128xbf16>
    %c0_5 = arith.constant 0 : index
    %c0_6 = arith.constant 0 : index
    %19 = vector.load %arg3[%c0_5, %c0_6] : memref<128x128xbf16, #tpu.memory_space<vmem>>, vector<128x128xbf16>
    %cst_7 = arith.constant dense<0.000000e+00> : vector<192x128xf32>
    %20 = tpu.matmul %18, %19, %cst_7 {dimension_numbers = #tpu.dot_dimension_numbers<[1], [0], [0], [1], [0, 0, 1, 1], [], []>} : vector<192x128xbf16>, vector<128x128xbf16>, vector<192x128xf32> -> vector<192x128xf32>
    %c0_8 = arith.constant 0 : index
    %c0_9 = arith.constant 0 : index
    %21 = vector.load %arg4[%c0_8, %c0_9] : memref<1x128xf32, #tpu.memory_space<vmem>>, vector<1x128xf32>
    %22 = vector.broadcast %21 : vector<1x128xf32> to vector<192x128xf32>
    %23 = arith.addf %20, %22 : vector<192x128xf32>
    %c0_10 = arith.constant 0 : index
    %c0_11 = arith.constant 0 : index
    %24 = vector.load %arg2[%c0_10, %c0_11] : memref<192x128xf32, #tpu.memory_space<vmem>>, vector<192x128xf32>
    %25 = arith.addf %24, %23 : vector<192x128xf32>
    %c0_12 = arith.constant 0 : index
    %c0_13 = arith.constant 0 : index
    %26 = vector.load %arg5[%c0_12, %c0_13] : memref<192x128xf32, #tpu.memory_space<vmem>>, vector<192x128xf32>
    tpu.vector_store %arg5[%c0_12, %c0_13], %25 {strides = array<i32>} : memref<192x128xf32, #tpu.memory_space<vmem>>, vector<192x128xf32>,
    return
  }
  func.func @transform_0(%arg0: i32, %arg1: i32) -> (i32, i32) {
    %c0_i32 = arith.constant 0 : i32
    %c0_i32_0 = arith.constant 0 : i32
    return %arg1, %c0_i32 : i32, i32
  }
  func.func @transform_1(%arg0: i32, %arg1: i32) -> (i32, i32) {
    %c0_i32 = arith.constant 0 : i32
    %c0_i32_0 = arith.constant 0 : i32
    return %c0_i32, %arg0 : i32, i32
  }
  func.func @transform_2(%arg0: i32, %arg1: i32) -> (i32, i32) {
    %c0_i32 = arith.constant 0 : i32
    %c0_i32_0 = arith.constant 0 : i32
    return %c0_i32, %arg0 : i32, i32
  }
  func.func @transform_3(%arg0: i32, %arg1: i32) -> (i32, i32) {
    %c0_i32 = arith.constant 0 : i32
    return %arg1, %arg0 : i32, i32
  }
}

</mosaic_0001>

<llo_original>
// kernel: tpu_custom_call.1
$region0: #{tpu_custom_call.1}
  #allocation0 [shape = 'u32[]', space=smem, size = 0x4, offset = 0x4, fixed_abs, tag = 'smem constant byte address 0x4 - core index']
  #allocation1 [shape = 'u32[144,128]{1,0:T(1,128)}', space=vmem, size = 0x12000, scoped, tag = 'internal scratch']
  %s0 = inlined_call_operand.hbm [shape: f32[192,128], index: 0, kind: input, shape index: {}]
  %s1 = inlined_call_operand.hbm [shape: bf16[128,128], index: 1, kind: input, shape index: {}]
  %s2 = inlined_call_operand.vmem [shape: f32[1,128], index: 2, kind: input, shape index: {}]
  %s3 = inlined_call_operand.hbm [shape: f32[192,128], index: 3, kind: output, shape index: {}]
  %s4 = sld [smem:[#allocation0]]
  $region30: #{tpu_custom_call.1} parent=0
    _
  %s6 = ssub.s32 1, %s4
  %s7 = scalar_select 0, %s6, %s4
  $region1: #{tpu_custom_call.1} parent=0
    #allocation2 [shape = 'u8[98304]{0}', space=vmem, size = 0x18000, scoped, tag = 'input window, operand 0, single buffered']
    #allocation3 [shape = 's32[1]{0}', space=sflag, size = 0x4, scoped, tag = 'scoped memory for tpu_custom_call.1']
    #allocation4 [shape = 's32[1]{0}', space=sflag, size = 0x4, scoped, tag = 'scoped memory for tpu_custom_call.1']
    #allocation5 [shape = 'u8[32768]{0}', space=vmem, size = 0x8000, scoped, tag = 'input window, operand 1, single buffered']
    #allocation6 [shape = 's32[1]{0}', space=sflag, size = 0x4, scoped, tag = 'scoped memory for tpu_custom_call.1']
    #allocation7 [shape = 'u8[98304]{0}', space=vmem, size = 0x18000, scoped, tag = 'output window, operand 0, single buffered']
    %8 = vsyncpa [#allocation3], 0
    %9 = vsyncpa [#allocation6], 0
    %10 = vsyncpa [#allocation4], 0
    // Predicated region
    $region2: #{tpu_custom_call.1} parent=1 // pred_check
      _
    $region3: #{tpu_custom_call.1} parent=1 // pred_check_branch
      %12 = sbr.rel (0) target = $region5
    $region4: #{tpu_custom_call.1} parent=1 // pred_region
      %s14 = ssub.s32 3072, 3072
      %15 = vsyncadd [#allocation3], %s14
      %s16 = sshll.u32 [#allocation2], 4
      %s17 = int_to_ptr.vmem [resolvable:$true] %s16
      %22 = dma.hbm_to_vmem [thread:$0]  %s0, 3072, %s17, [#allocation3], 128, 128, 8
    $region5: #{tpu_custom_call.1} parent=1 // pred_fallthru
      _
    // Predicated region
    $region6: #{tpu_custom_call.1} parent=1 // pred_check
      _
    $region7: #{tpu_custom_call.1} parent=1 // pred_check_branch
      %24 = sbr.rel (0) target = $region9
    $region8: #{tpu_custom_call.1} parent=1 // pred_region
      %s26 = ssub.s32 1024, 1024
      %27 = vsyncadd [#allocation6], %s26
      %s28 = sshll.u32 [#allocation5], 4
      %s29 = int_to_ptr.vmem [resolvable:$true] %s28
      %34 = dma.hbm_to_vmem [thread:$0]  %s1, 1024, %s29, [#allocation6], 64, 64, 4
    $region9: #{tpu_custom_call.1} parent=1 // pred_fallthru
      _
    // Predicated region
    $region10: #{tpu_custom_call.1} parent=1 // pred_check
      _
    $region11: #{tpu_custom_call.1} parent=1 // pred_check_branch
      %36 = sbr.rel (0) target = $region13
    $region12: #{tpu_custom_call.1} parent=1 // pred_region
      _
    $region13: #{tpu_custom_call.1} parent=1 // pred_fallthru
      _
    // Predicated region
    $region14: #{tpu_custom_call.1} parent=1 // pred_check
      _
    $region15: #{tpu_custom_call.1} parent=1 // pred_check_branch
      %38 = sbr.rel (0) target = $region17
    $region16: #{tpu_custom_call.1} parent=1 // pred_region
      %39 = dma.done [#allocation3], 3072
    $region17: #{tpu_custom_call.1} parent=1 // pred_fallthru
      _
    // Predicated region
    $region18: #{tpu_custom_call.1} parent=1 // pred_check
      _
    $region19: #{tpu_custom_call.1} parent=1 // pred_check_branch
      %41 = sbr.rel (0) target = $region21
    $region20: #{tpu_custom_call.1} parent=1 // pred_region
      %42 = dma.done [#allocation6], 1024
    $region21: #{tpu_custom_call.1} parent=1 // pred_fallthru
      _
    %v44 = vld [vmem:[#allocation2] sm:$0xff]
    %v45 = vld [vmem:[#allocation2 + $0x8] sm:$0xff]
    %v46 = vld [vmem:[#allocation2 + $0x10] sm:$0xff]
    %v47 = vld [vmem:[#allocation2 + $0x18] sm:$0xff]
    %v48 = vld [vmem:[#allocation2 + $0x20] sm:$0xff]
    %v49 = vld [vmem:[#allocation2 + $0x28] sm:$0xff]
    %v50 = vld [vmem:[#allocation2 + $0x30] sm:$0xff]
    %v51 = vld [vmem:[#allocation2 + $0x38] sm:$0xff]
    %v52 = vld [vmem:[#allocation2 + $0x40] sm:$0xff]
    %v53 = vld [vmem:[#allocation2 + $0x48] sm:$0xff]
    %v54 = vld [vmem:[#allocation2 + $0x50] sm:$0xff]
    %v55 = vld [vmem:[#allocation2 + $0x58] sm:$0xff]
    %v56 = vld [vmem:[#allocation2 + $0x60] sm:$0xff]
    %v57 = vld [vmem:[#allocation2 + $0x68] sm:$0xff]
    %v58 = vld [vmem:[#allocation2 + $0x70] sm:$0xff]
    %v59 = vld [vmem:[#allocation2 + $0x78] sm:$0xff]
    %v60 = vld [vmem:[#allocation2 + $0x80] sm:$0xff]
    %v61 = vld [vmem:[#allocation2 + $0x88] sm:$0xff]
    %v62 = vld [vmem:[#allocation2 + $0x90] sm:$0xff]
    %v63 = vld [vmem:[#allocation2 + $0x98] sm:$0xff]
    %v64 = vld [vmem:[#allocation2 + $0xa0] sm:$0xff]
    %v65 = vld [vmem:[#allocation2 + $0xa8] sm:$0xff]
    %v66 = vld [vmem:[#allocation2 + $0xb0] sm:$0xff]
    %v67 = vld [vmem:[#allocation2 + $0xb8] sm:$0xff]
    %68 = vadd.xlane.f32.xlu0 %v44
    %v69 = vpop.xlane.xlu0 %68
    %70 = vadd.xlane.f32.xlu0 %v45
    %v71 = vpop.xlane.xlu0 %70
    %72 = vadd.xlane.f32.xlu0 %v46
    %v73 = vpop.xlane.xlu0 %72
    %74 = vadd.xlane.f32.xlu0 %v47
    %v75 = vpop.xlane.xlu0 %74
    %76 = vadd.xlane.f32.xlu0 %v48
    %v77 = vpop.xlane.xlu0 %76
    %78 = vadd.xlane.f32.xlu0 %v49
    %v79 = vpop.xlane.xlu0 %78
    %80 = vadd.xlane.f32.xlu0 %v50
    %v81 = vpop.xlane.xlu0 %80
    %82 = vadd.xlane.f32.xlu0 %v51
    %v83 = vpop.xlane.xlu0 %82
    %84 = vadd.xlane.f32.xlu0 %v52
    %v85 = vpop.xlane.xlu0 %84
    %86 = vadd.xlane.f32.xlu0 %v53
    %v87 = vpop.xlane.xlu0 %86
    %88 = vadd.xlane.f32.xlu0 %v54
    %v89 = vpop.xlane.xlu0 %88
    %90 = vadd.xlane.f32.xlu0 %v55
    %v91 = vpop.xlane.xlu0 %90
    %92 = vadd.xlane.f32.xlu0 %v56
    %v93 = vpop.xlane.xlu0 %92
    %94 = vadd.xlane.f32.xlu0 %v57
    %v95 = vpop.xlane.xlu0 %94
    %96 = vadd.xlane.f32.xlu0 %v58
    %v97 = vpop.xlane.xlu0 %96
    %98 = vadd.xlane.f32.xlu0 %v59
    %v99 = vpop.xlane.xlu0 %98
    %100 = vadd.xlane.f32.xlu0 %v60
    %v101 = vpop.xlane.xlu0 %100
    %102 = vadd.xlane.f32.xlu0 %v61
    %v103 = vpop.xlane.xlu0 %102
    %104 = vadd.xlane.f32.xlu0 %v62
    %v105 = vpop.xlane.xlu0 %104
    %106 = vadd.xlane.f32.xlu0 %v63
    %v107 = vpop.xlane.xlu0 %106
    %108 = vadd.xlane.f32.xlu0 %v64
    %v109 = vpop.xlane.xlu0 %108
    %110 = vadd.xlane.f32.xlu0 %v65
    %v111 = vpop.xlane.xlu0 %110
    %112 = vadd.xlane.f32.xlu0 %v66
    %v113 = vpop.xlane.xlu0 %112
    %114 = vadd.xlane.f32.xlu0 %v67
    %v115 = vpop.xlane.xlu0 %114
    %v116 = vrcp.pop 128.0
    %v117 = vmul.f32 %v69, %v116
    %v118 = vmul.f32 %v71, %v116
    %v119 = vmul.f32 %v73, %v116
    %v120 = vmul.f32 %v75, %v116
    %v121 = vmul.f32 %v77, %v116
    %v122 = vmul.f32 %v79, %v116
    %v123 = vmul.f32 %v81, %v116
    %v124 = vmul.f32 %v83, %v116
    %v125 = vmul.f32 %v85, %v116
    %v126 = vmul.f32 %v87, %v116
    %v127 = vmul.f32 %v89, %v116
    %v128 = vmul.f32 %v91, %v116
    %v129 = vmul.f32 %v93, %v116
    %v130 = vmul.f32 %v95, %v116
    %v131 = vmul.f32 %v97, %v116
    %v132 = vmul.f32 %v99, %v116
    %v133 = vmul.f32 %v101, %v116
    %v134 = vmul.f32 %v103, %v116
    %v135 = vmul.f32 %v105, %v116
    %v136 = vmul.f32 %v107, %v116
    %v137 = vmul.f32 %v109, %v116
    %v138 = vmul.f32 %v111, %v116
    %v139 = vmul.f32 %v113, %v116
    %v140 = vmul.f32 %v115, %v116
    %v141 = vsub.f32 %v44, %v117
    %v142 = vsub.f32 %v45, %v118
    %v143 = vsub.f32 %v46, %v119
    %v144 = vsub.f32 %v47, %v120
    %v145 = vsub.f32 %v48, %v121
    %v146 = vsub.f32 %v49, %v122
    %v147 = vsub.f32 %v50, %v123
    %v148 = vsub.f32 %v51, %v124
    %v149 = vsub.f32 %v52, %v125
    %v150 = vsub.f32 %v53, %v126
    %v151 = vsub.f32 %v54, %v127
    %v152 = vsub.f32 %v55, %v128
    %v153 = vsub.f32 %v56, %v129
    %v154 = vsub.f32 %v57, %v130
    %v155 = vsub.f32 %v58, %v131
    %v156 = vsub.f32 %v59, %v132
    %v157 = vsub.f32 %v60, %v133
    %v158 = vsub.f32 %v61, %v134
    %v159 = vsub.f32 %v62, %v135
    %v160 = vsub.f32 %v63, %v136
    %v161 = vsub.f32 %v64, %v137
    %v162 = vsub.f32 %v65, %v138
    %v163 = vsub.f32 %v66, %v139
    %v164 = vsub.f32 %v67, %v140
    %v165 = vmul.f32 %v141, %v141
    %v166 = vmul.f32 %v142, %v142
    %v167 = vmul.f32 %v143, %v143
    %v168 = vmul.f32 %v144, %v144
    %v169 = vmul.f32 %v145, %v145
    %v170 = vmul.f32 %v146, %v146
    %v171 = vmul.f32 %v147, %v147
    %v172 = vmul.f32 %v148, %v148
    %v173 = vmul.f32 %v149, %v149
    %v174 = vmul.f32 %v150, %v150
    %v175 = vmul.f32 %v151, %v151
    %v176 = vmul.f32 %v152, %v152
    %v177 = vmul.f32 %v153, %v153
    %v178 = vmul.f32 %v154, %v154
    %v179 = vmul.f32 %v155, %v155
    %v180 = vmul.f32 %v156, %v156
    %v181 = vmul.f32 %v157, %v157
    %v182 = vmul.f32 %v158, %v158
    %v183 = vmul.f32 %v159, %v159
    %v184 = vmul.f32 %v160, %v160
    %v185 = vmul.f32 %v161, %v161
    %v186 = vmul.f32 %v162, %v162
    %v187 = vmul.f32 %v163, %v163
    %v188 = vmul.f32 %v164, %v164
    %189 = vadd.xlane.f32.xlu0 %v165
    %v190 = vpop.xlane.xlu0 %189
    %191 = vadd.xlane.f32.xlu0 %v166
    %v192 = vpop.xlane.xlu0 %191
    %193 = vadd.xlane.f32.xlu0 %v167
    %v194 = vpop.xlane.xlu0 %193
    %195 = vadd.xlane.f32.xlu0 %v168
    %v196 = vpop.xlane.xlu0 %195
    %197 = vadd.xlane.f32.xlu0 %v169
    %v198 = vpop.xlane.xlu0 %197
    %199 = vadd.xlane.f32.xlu0 %v170
    %v200 = vpop.xlane.xlu0 %199
    %201 = vadd.xlane.f32.xlu0 %v171
    %v202 = vpop.xlane.xlu0 %201
    %203 = vadd.xlane.f32.xlu0 %v172
    %v204 = vpop.xlane.xlu0 %203
    %205 = vadd.xlane.f32.xlu0 %v173
    %v206 = vpop.xlane.xlu0 %205
    %207 = vadd.xlane.f32.xlu0 %v174
    %v208 = vpop.xlane.xlu0 %207
    %209 = vadd.xlane.f32.xlu0 %v175
    %v210 = vpop.xlane.xlu0 %209
    %211 = vadd.xlane.f32.xlu0 %v176
    %v212 = vpop.xlane.xlu0 %211
    %213 = vadd.xlane.f32.xlu0 %v177
    %v214 = vpop.xlane.xlu0 %213
    %215 = vadd.xlane.f32.xlu0 %v178
    %v216 = vpop.xlane.xlu0 %215
    %217 = vadd.xlane.f32.xlu0 %v179
    %v218 = vpop.xlane.xlu0 %217
    %219 = vadd.xlane.f32.xlu0 %v180
    %v220 = vpop.xlane.xlu0 %219
    %221 = vadd.xlane.f32.xlu0 %v181
    %v222 = vpop.xlane.xlu0 %221
    %223 = vadd.xlane.f32.xlu0 %v182
    %v224 = vpop.xlane.xlu0 %223
    %225 = vadd.xlane.f32.xlu0 %v183
    %v226 = vpop.xlane.xlu0 %225
    %227 = vadd.xlane.f32.xlu0 %v184
    %v228 = vpop.xlane.xlu0 %227
    %229 = vadd.xlane.f32.xlu0 %v185
    %v230 = vpop.xlane.xlu0 %229
    %231 = vadd.xlane.f32.xlu0 %v186
    %v232 = vpop.xlane.xlu0 %231
    %233 = vadd.xlane.f32.xlu0 %v187
    %v234 = vpop.xlane.xlu0 %233
    %235 = vadd.xlane.f32.xlu0 %v188
    %v236 = vpop.xlane.xlu0 %235
    %v237 = vmul.f32 %v190, 0.007874016
    %v238 = vmul.f32 %v192, 0.007874016
    %v239 = vmul.f32 %v194, 0.007874016
    %v240 = vmul.f32 %v196, 0.007874016
    %v241 = vmul.f32 %v198, 0.007874016
    %v242 = vmul.f32 %v200, 0.007874016
    %v243 = vmul.f32 %v202, 0.007874016
    %v244 = vmul.f32 %v204, 0.007874016
    %v245 = vmul.f32 %v206, 0.007874016
    %v246 = vmul.f32 %v208, 0.007874016
    %v247 = vmul.f32 %v210, 0.007874016
    %v248 = vmul.f32 %v212, 0.007874016
    %v249 = vmul.f32 %v214, 0.007874016
    %v250 = vmul.f32 %v216, 0.007874016
    %v251 = vmul.f32 %v218, 0.007874016
    %v252 = vmul.f32 %v220, 0.007874016
    %v253 = vmul.f32 %v222, 0.007874016
    %v254 = vmul.f32 %v224, 0.007874016
    %v255 = vmul.f32 %v226, 0.007874016
    %v256 = vmul.f32 %v228, 0.007874016
    %v257 = vmul.f32 %v230, 0.007874016
    %v258 = vmul.f32 %v232, 0.007874016
    %v259 = vmul.f32 %v234, 0.007874016
    %v260 = vmul.f32 %v236, 0.007874016
    %v261 = vrsqrt.pop %v237
    %v262 = vmul.f32 %v237, %v261
    %vm263 = vcmp.eq.f32.partialorder %v237, inf
    %v264 = vsel %vm263, %v237, %v262
    %vm265 = vcmp.eq.f32.partialorder %v237, 0.0
    %v266 = vand.u32 %v237, 2147483648
    %v267 = vsel %vm265, %v266, %v264
    %v268 = vrsqrt.pop %v238
    %v269 = vmul.f32 %v238, %v268
    %vm270 = vcmp.eq.f32.partialorder %v238, inf
    %v271 = vsel %vm270, %v238, %v269
    %vm272 = vcmp.eq.f32.partialorder %v238, 0.0
    %v273 = vand.u32 %v238, 2147483648
    %v274 = vsel %vm272, %v273, %v271
    %v275 = vrsqrt.pop %v239
    %v276 = vmul.f32 %v239, %v275
    %vm277 = vcmp.eq.f32.partialorder %v239, inf
    %v278 = vsel %vm277, %v239, %v276
    %vm279 = vcmp.eq.f32.partialorder %v239, 0.0
    %v280 = vand.u32 %v239, 2147483648
    %v281 = vsel %vm279, %v280, %v278
    %v282 = vrsqrt.pop %v240
    %v283 = vmul.f32 %v240, %v282
    %vm284 = vcmp.eq.f32.partialorder %v240, inf
    %v285 = vsel %vm284, %v240, %v283
    %vm286 = vcmp.eq.f32.partialorder %v240, 0.0
    %v287 = vand.u32 %v240, 2147483648
    %v288 = vsel %vm286, %v287, %v285
    %v289 = vrsqrt.pop %v241
    %v290 = vmul.f32 %v241, %v289
    %vm291 = vcmp.eq.f32.partialorder %v241, inf
    %v292 = vsel %vm291, %v241, %v290
    %vm293 = vcmp.eq.f32.partialorder %v241, 0.0
    %v294 = vand.u32 %v241, 2147483648
    %v295 = vsel %vm293, %v294, %v292
    %v296 = vrsqrt.pop %v242
    %v297 = vmul.f32 %v242, %v296
    %vm298 = vcmp.eq.f32.partialorder %v242, inf
    %v299 = vsel %vm298, %v242, %v297
    %vm300 = vcmp.eq.f32.partialorder %v242, 0.0
    %v301 = vand.u32 %v242, 2147483648
    %v302 = vsel %vm300, %v301, %v299
    %v303 = vrsqrt.pop %v243
    %v304 = vmul.f32 %v243, %v303
    %vm305 = vcmp.eq.f32.partialorder %v243, inf
    %v306 = vsel %vm305, %v243, %v304
    %vm307 = vcmp.eq.f32.partialorder %v243, 0.0
    %v308 = vand.u32 %v243, 2147483648
    %v309 = vsel %vm307, %v308, %v306
    %v310 = vrsqrt.pop %v244
    %v311 = vmul.f32 %v244, %v310
    %vm312 = vcmp.eq.f32.partialorder %v244, inf
    %v313 = vsel %vm312, %v244, %v311
    %vm314 = vcmp.eq.f32.partialorder %v244, 0.0
    %v315 = vand.u32 %v244, 2147483648
    %v316 = vsel %vm314, %v315, %v313
    %v317 = vrsqrt.pop %v245
    %v318 = vmul.f32 %v245, %v317
    %vm319 = vcmp.eq.f32.partialorder %v245, inf
    %v320 = vsel %vm319, %v245, %v318
    %vm321 = vcmp.eq.f32.partialorder %v245, 0.0
    %v322 = vand.u32 %v245, 2147483648
    %v323 = vsel %vm321, %v322, %v320
    %v324 = vrsqrt.pop %v246
    %v325 = vmul.f32 %v246, %v324
    %vm326 = vcmp.eq.f32.partialorder %v246, inf
    %v327 = vsel %vm326, %v246, %v325
    %vm328 = vcmp.eq.f32.partialorder %v246, 0.0
    %v329 = vand.u32 %v246, 2147483648
    %v330 = vsel %vm328, %v329, %v327
    %v331 = vrsqrt.pop %v247
    %v332 = vmul.f32 %v247, %v331
    %vm333 = vcmp.eq.f32.partialorder %v247, inf
    %v334 = vsel %vm333, %v247, %v332
    %vm335 = vcmp.eq.f32.partialorder %v247, 0.0
    %v336 = vand.u32 %v247, 2147483648
    %v337 = vsel %vm335, %v336, %v334
    %v338 = vrsqrt.pop %v248
    %v339 = vmul.f32 %v248, %v338
    %vm340 = vcmp.eq.f32.partialorder %v248, inf
    %v341 = vsel %vm340, %v248, %v339
    %vm342 = vcmp.eq.f32.partialorder %v248, 0.0
    %v343 = vand.u32 %v248, 2147483648
    %v344 = vsel %vm342, %v343, %v341
    %v345 = vrsqrt.pop %v249
    %v346 = vmul.f32 %v249, %v345
    %vm347 = vcmp.eq.f32.partialorder %v249, inf
    %v348 = vsel %vm347, %v249, %v346
    %vm349 = vcmp.eq.f32.partialorder %v249, 0.0
    %v350 = vand.u32 %v249, 2147483648
    %v351 = vsel %vm349, %v350, %v348
    %v352 = vrsqrt.pop %v250
    %v353 = vmul.f32 %v250, %v352
    %vm354 = vcmp.eq.f32.partialorder %v250, inf
    %v355 = vsel %vm354, %v250, %v353
    %vm356 = vcmp.eq.f32.partialorder %v250, 0.0
    %v357 = vand.u32 %v250, 2147483648
    %v358 = vsel %vm356, %v357, %v355
    %v359 = vrsqrt.pop %v251
    %v360 = vmul.f32 %v251, %v359
    %vm361 = vcmp.eq.f32.partialorder %v251, inf
    %v362 = vsel %vm361, %v251, %v360
    %vm363 = vcmp.eq.f32.partialorder %v251, 0.0
    %v364 = vand.u32 %v251, 2147483648
    %v365 = vsel %vm363, %v364, %v362
    %v366 = vrsqrt.pop %v252
    %v367 = vmul.f32 %v252, %v366
    %vm368 = vcmp.eq.f32.partialorder %v252, inf
    %v369 = vsel %vm368, %v252, %v367
    %vm370 = vcmp.eq.f32.partialorder %v252, 0.0
    %v371 = vand.u32 %v252, 2147483648
    %v372 = vsel %vm370, %v371, %v369
    %v373 = vrsqrt.pop %v253
    %v374 = vmul.f32 %v253, %v373
    %vm375 = vcmp.eq.f32.partialorder %v253, inf
    %v376 = vsel %vm375, %v253, %v374
    %vm377 = vcmp.eq.f32.partialorder %v253, 0.0
    %v378 = vand.u32 %v253, 2147483648
    %v379 = vsel %vm377, %v378, %v376
    %v380 = vrsqrt.pop %v254
    %v381 = vmul.f32 %v254, %v380
    %vm382 = vcmp.eq.f32.partialorder %v254, inf
    %v383 = vsel %vm382, %v254, %v381
    %vm384 = vcmp.eq.f32.partialorder %v254, 0.0
    %v385 = vand.u32 %v254, 2147483648
    %v386 = vsel %vm384, %v385, %v383
    %v387 = vrsqrt.pop %v255
    %v388 = vmul.f32 %v255, %v387
    %vm389 = vcmp.eq.f32.partialorder %v255, inf
    %v390 = vsel %vm389, %v255, %v388
    %vm391 = vcmp.eq.f32.partialorder %v255, 0.0
    %v392 = vand.u32 %v255, 2147483648
    %v393 = vsel %vm391, %v392, %v390
    %v394 = vrsqrt.pop %v256
    %v395 = vmul.f32 %v256, %v394
    %vm396 = vcmp.eq.f32.partialorder %v256, inf
    %v397 = vsel %vm396, %v256, %v395
    %vm398 = vcmp.eq.f32.partialorder %v256, 0.0
    %v399 = vand.u32 %v256, 2147483648
    %v400 = vsel %vm398, %v399, %v397
    %v401 = vrsqrt.pop %v257
    %v402 = vmul.f32 %v257, %v401
    %vm403 = vcmp.eq.f32.partialorder %v257, inf
    %v404 = vsel %vm403, %v257, %v402
    %vm405 = vcmp.eq.f32.partialorder %v257, 0.0
    %v406 = vand.u32 %v257, 2147483648
    %v407 = vsel %vm405, %v406, %v404
    %v408 = vrsqrt.pop %v258
    %v409 = vmul.f32 %v258, %v408
    %vm410 = vcmp.eq.f32.partialorder %v258, inf
    %v411 = vsel %vm410, %v258, %v409
    %vm412 = vcmp.eq.f32.partialorder %v258, 0.0
    %v413 = vand.u32 %v258, 2147483648
    %v414 = vsel %vm412, %v413, %v411
    %v415 = vrsqrt.pop %v259
    %v416 = vmul.f32 %v259, %v415
    %vm417 = vcmp.eq.f32.partialorder %v259, inf
    %v418 = vsel %vm417, %v259, %v416
    %vm419 = vcmp.eq.f32.partialorder %v259, 0.0
    %v420 = vand.u32 %v259, 2147483648
    %v421 = vsel %vm419, %v420, %v418
    %v422 = vrsqrt.pop %v260
    %v423 = vmul.f32 %v260, %v422
    %vm424 = vcmp.eq.f32.partialorder %v260, inf
    %v425 = vsel %vm424, %v260, %v423
    %vm426 = vcmp.eq.f32.partialorder %v260, 0.0
    %v427 = vand.u32 %v260, 2147483648
    %v428 = vsel %vm426, %v427, %v425
    %v429 = vadd.f32 %v267, 1e-06
    %v430 = vadd.f32 %v274, 1e-06
    %v431 = vadd.f32 %v281, 1e-06
    %v432 = vadd.f32 %v288, 1e-06
    %v433 = vadd.f32 %v295, 1e-06
    %v434 = vadd.f32 %v302, 1e-06
    %v435 = vadd.f32 %v309, 1e-06
    %v436 = vadd.f32 %v316, 1e-06
    %v437 = vadd.f32 %v323, 1e-06
    %v438 = vadd.f32 %v330, 1e-06
    %v439 = vadd.f32 %v337, 1e-06
    %v440 = vadd.f32 %v344, 1e-06
    %v441 = vadd.f32 %v351, 1e-06
    %v442 = vadd.f32 %v358, 1e-06
    %v443 = vadd.f32 %v365, 1e-06
    %v444 = vadd.f32 %v372, 1e-06
    %v445 = vadd.f32 %v379, 1e-06
    %v446 = vadd.f32 %v386, 1e-06
    %v447 = vadd.f32 %v393, 1e-06
    %v448 = vadd.f32 %v400, 1e-06
    %v449 = vadd.f32 %v407, 1e-06
    %v450 = vadd.f32 %v414, 1e-06
    %v451 = vadd.f32 %v421, 1e-06
    %v452 = vadd.f32 %v428, 1e-06
    %v453 = vrcp.pop %v429
    %v454 = vrcp.pop %v430
    %v455 = vrcp.pop %v431
    %v456 = vrcp.pop %v432
    %v457 = vrcp.pop %v433
    %v458 = vrcp.pop %v434
    %v459 = vrcp.pop %v435
    %v460 = vrcp.pop %v436
    %v461 = vrcp.pop %v437
    %v462 = vrcp.pop %v438
    %v463 = vrcp.pop %v439
    %v464 = vrcp.pop %v440
    %v465 = vrcp.pop %v441
    %v466 = vrcp.pop %v442
    %v467 = vrcp.pop %v443
    %v468 = vrcp.pop %v444
    %v469 = vrcp.pop %v445
    %v470 = vrcp.pop %v446
    %v471 = vrcp.pop %v447
    %v472 = vrcp.pop %v448
    %v473 = vrcp.pop %v449
    %v474 = vrcp.pop %v450
    %v475 = vrcp.pop %v451
    %v476 = vrcp.pop %v452
    %v477 = vmul.f32 %v141, %v453
    %v478 = vmul.f32 %v142, %v454
    %v479 = vmul.f32 %v143, %v455
    %v480 = vmul.f32 %v144, %v456
    %v481 = vmul.f32 %v145, %v457
    %v482 = vmul.f32 %v146, %v458
    %v483 = vmul.f32 %v147, %v459
    %v484 = vmul.f32 %v148, %v460
    %v485 = vmul.f32 %v149, %v461
    %v486 = vmul.f32 %v150, %v462
    %v487 = vmul.f32 %v151, %v463
    %v488 = vmul.f32 %v152, %v464
    %v489 = vmul.f32 %v153, %v465
    %v490 = vmul.f32 %v154, %v466
    %v491 = vmul.f32 %v155, %v467
    %v492 = vmul.f32 %v156, %v468
    %v493 = vmul.f32 %v157, %v469
    %v494 = vmul.f32 %v158, %v470
    %v495 = vmul.f32 %v159, %v471
    %v496 = vmul.f32 %v160, %v472
    %v497 = vmul.f32 %v161, %v473
    %v498 = vmul.f32 %v162, %v474
    %v499 = vmul.f32 %v163, %v475
    %v500 = vmul.f32 %v164, %v476
    %v501 = vpack.c.bf16 %v478, %v477
    %v502 = vpack.c.bf16 %v480, %v479
    %v503 = vpack.c.bf16 %v482, %v481
    %v504 = vpack.c.bf16 %v484, %v483
    %v505 = vpack.c.bf16 %v486, %v485
    %v506 = vpack.c.bf16 %v488, %v487
    %v507 = vpack.c.bf16 %v490, %v489
    %v508 = vpack.c.bf16 %v492, %v491
    %v509 = vpack.c.bf16 %v494, %v493
    %v510 = vpack.c.bf16 %v496, %v495
    %v511 = vpack.c.bf16 %v498, %v497
    %v512 = vpack.c.bf16 %v500, %v499
    %v513 = vld [vmem:[#allocation5] sm:$0xf]
    %v514 = vld [vmem:[#allocation5 + $0x4] sm:$0xf]
    %v515 = vld [vmem:[#allocation5 + $0x8] sm:$0xf]
    %v516 = vld [vmem:[#allocation5 + $0xc] sm:$0xf]
    %v517 = vld [vmem:[#allocation5 + $0x10] sm:$0xf]
    %v518 = vld [vmem:[#allocation5 + $0x14] sm:$0xf]
    %v519 = vld [vmem:[#allocation5 + $0x18] sm:$0xf]
    %v520 = vld [vmem:[#allocation5 + $0x1c] sm:$0xf]
    %v521 = vld [vmem:[#allocation5 + $0x20] sm:$0xf]
    %v522 = vld [vmem:[#allocation5 + $0x24] sm:$0xf]
    %v523 = vld [vmem:[#allocation5 + $0x28] sm:$0xf]
    %v524 = vld [vmem:[#allocation5 + $0x2c] sm:$0xf]
    %v525 = vld [vmem:[#allocation5 + $0x30] sm:$0xf]
    %v526 = vld [vmem:[#allocation5 + $0x34] sm:$0xf]
    %v527 = vld [vmem:[#allocation5 + $0x38] sm:$0xf]
    %v528 = vld [vmem:[#allocation5 + $0x3c] sm:$0xf]
    %v529 = vld [vmem:[%s2] sm:$0x1]
    %v531 = vlaneseq
    %v532 = vshrl.u32 %v531, 7
    %v533 = vsub.s32 0, %v532
    %v534 = vrot.slane %v529, %v533
    %v552 = vunpack.c.l.b16 %v513
    %v553 = vunpack.c.l.b16 %v514
    %v554 = vunpack.c.l.b16 %v515
    %v555 = vunpack.c.l.b16 %v516
    %v556 = vunpack.c.l.b16 %v517
    %v557 = vunpack.c.l.b16 %v518
    %v558 = vunpack.c.l.b16 %v519
    %v559 = vunpack.c.l.b16 %v520
    %v560 = vunpack.c.l.b16 %v521
    %v561 = vunpack.c.l.b16 %v522
    %v562 = vunpack.c.l.b16 %v523
    %v563 = vunpack.c.l.b16 %v524
    %v564 = vunpack.c.l.b16 %v525
    %v565 = vunpack.c.l.b16 %v526
    %v566 = vunpack.c.l.b16 %v527
    %v567 = vunpack.c.l.b16 %v528
    %v568 = vpack.c.b16 %v553, %v552
    %v569 = vpack.c.b16 %v555, %v554
    %v570 = vpack.c.b16 %v557, %v556
    %v571 = vpack.c.b16 %v559, %v558
    %v572 = vpack.c.b16 %v561, %v560
    %v573 = vpack.c.b16 %v563, %v562
    %v574 = vpack.c.b16 %v565, %v564
    %v575 = vpack.c.b16 %v567, %v566
    %584 = vmatprep.subr.bf16.mxu0 0
    %585 = vmatpush1.bf16.msra.mxu0 %v575
    %586 = vmatprep.subr.bf16.mxu0 0
    %587 = vmatpush1.bf16.msra.mxu0 %v574
    %588 = vmatprep.subr.bf16.mxu0 0
    %589 = vmatpush1.bf16.msra.mxu0 %v573
    %590 = vmatprep.subr.bf16.mxu0 0
    %591 = vmatpush1.bf16.msra.mxu0 %v572
    %592 = vmatprep.subr.bf16.mxu0 0
    %593 = vmatpush1.bf16.msra.mxu0 %v571
    %594 = vmatprep.subr.bf16.mxu0 0
    %595 = vmatpush1.bf16.msra.mxu0 %v570
    %596 = vmatprep.subr.bf16.mxu0 0
    %597 = vmatpush1.bf16.msra.mxu0 %v569
    %598 = vmatprep.subr.bf16.mxu0 0
    %599 = vmatpush1.bf16.msra.mxu0 %v568
    %600 = vmatprep.subr.bf16.mxu0 0
    %601 = vmatpush2.bf16.msra.mxu0 0
    %602 = vmatprep.subr.bf16.mxu0 0
    %603 = vmatpush2.bf16.msra.mxu0 0
    %604 = vmatprep.subr.bf16.mxu0 0
    %605 = vmatpush2.bf16.msra.mxu0 0
    %606 = vmatprep.subr.bf16.mxu0 0
    %607 = vmatpush2.bf16.msra.mxu0 0
    %608 = vmatprep.subr.bf16.mxu0 0
    %609 = vmatpush2.bf16.msra.mxu0 0
    %610 = vmatprep.subr.bf16.mxu0 0
    %611 = vmatpush2.bf16.msra.mxu0 0
    %612 = vmatprep.subr.bf16.mxu0 0
    %613 = vmatpush2.bf16.msra.mxu0 0
    %614 = vmatprep.subr.bf16.mxu0 0
    %615 = vmatpush2.bf16.msra.mxu0 0
    %616 = vmatprep.mubr.bf16.mxu0 0
    %617 = vmatmul.mubr.bf16.gmra.mxu0 %v501
    %v618 = vpop.f32.mrf.mxu0
    %v619 = vadd.f32 %v534, %v618
    %v620 = vpop.f32.mrf.mxu0
    %v621 = vpop.f32.mrf.mxu0
    %v622 = vadd.f32 %v534, %v621
    %v623 = vpop.f32.mrf.mxu0
    %624 = vmatprep.mubr.bf16.mxu0 0
    %625 = vmatmul.mubr.bf16.gmra.mxu0 %v502
    %v626 = vpop.f32.mrf.mxu0
    %v627 = vadd.f32 %v534, %v626
    %v628 = vpop.f32.mrf.mxu0
    %v629 = vpop.f32.mrf.mxu0
    %v630 = vadd.f32 %v534, %v629
    %v631 = vpop.f32.mrf.mxu0
    %632 = vmatprep.mubr.bf16.mxu0 0
    %633 = vmatmul.mubr.bf16.gmra.mxu0 %v503
    %v634 = vpop.f32.mrf.mxu0
    %v635 = vadd.f32 %v534, %v634
    %v636 = vpop.f32.mrf.mxu0
    %v637 = vpop.f32.mrf.mxu0
    %v638 = vadd.f32 %v534, %v637
    %v639 = vpop.f32.mrf.mxu0
    %640 = vmatprep.mubr.bf16.mxu0 0
    %641 = vmatmul.mubr.bf16.gmra.mxu0 %v504
    %v642 = vpop.f32.mrf.mxu0
    %v643 = vadd.f32 %v534, %v642
    %v644 = vpop.f32.mrf.mxu0
    %v645 = vpop.f32.mrf.mxu0
    %v646 = vadd.f32 %v534, %v645
    %v647 = vpop.f32.mrf.mxu0
    %648 = vmatprep.mubr.bf16.mxu0 0
    %649 = vmatmul.mubr.bf16.gmra.mxu0 %v505
    %v650 = vpop.f32.mrf.mxu0
    %v651 = vadd.f32 %v534, %v650
    %v652 = vpop.f32.mrf.mxu0
    %v653 = vpop.f32.mrf.mxu0
    %v654 = vadd.f32 %v534, %v653
    %v655 = vpop.f32.mrf.mxu0
    %656 = vmatprep.mubr.bf16.mxu0 0
    %657 = vmatmul.mubr.bf16.gmra.mxu0 %v506
    %v658 = vpop.f32.mrf.mxu0
    %v659 = vadd.f32 %v534, %v658
    %v660 = vpop.f32.mrf.mxu0
    %v661 = vpop.f32.mrf.mxu0
    %v662 = vadd.f32 %v534, %v661
    %v663 = vpop.f32.mrf.mxu0
    %664 = vmatprep.mubr.bf16.mxu0 0
    %665 = vmatmul.mubr.bf16.gmra.mxu0 %v507
    %v666 = vpop.f32.mrf.mxu0
    %v667 = vadd.f32 %v534, %v666
    %v668 = vpop.f32.mrf.mxu0
    %v669 = vpop.f32.mrf.mxu0
    %v670 = vadd.f32 %v534, %v669
    %v671 = vpop.f32.mrf.mxu0
    %672 = vmatprep.mubr.bf16.mxu0 0
    %673 = vmatmul.mubr.bf16.gmra.mxu0 %v508
    %v674 = vpop.f32.mrf.mxu0
    %v675 = vadd.f32 %v534, %v674
    %v676 = vpop.f32.mrf.mxu0
    %v677 = vpop.f32.mrf.mxu0
    %v678 = vadd.f32 %v534, %v677
    %v679 = vpop.f32.mrf.mxu0
    %680 = vmatprep.mubr.bf16.mxu0 0
    %681 = vmatmul.mubr.bf16.gmra.mxu0 %v509
    %v682 = vpop.f32.mrf.mxu0
    %v683 = vadd.f32 %v534, %v682
    %v684 = vpop.f32.mrf.mxu0
    %v685 = vpop.f32.mrf.mxu0
    %v686 = vadd.f32 %v534, %v685
    %v687 = vpop.f32.mrf.mxu0
    %688 = vmatprep.mubr.bf16.mxu0 0
    %689 = vmatmul.mubr.bf16.gmra.mxu0 %v510
    %v690 = vpop.f32.mrf.mxu0
    %v691 = vadd.f32 %v534, %v690
    %v692 = vpop.f32.mrf.mxu0
    %v693 = vpop.f32.mrf.mxu0
    %v694 = vadd.f32 %v534, %v693
    %v695 = vpop.f32.mrf.mxu0
    %696 = vmatprep.mubr.bf16.mxu0 0
    %697 = vmatmul.mubr.bf16.gmra.mxu0 %v511
    %v698 = vpop.f32.mrf.mxu0
    %v699 = vadd.f32 %v534, %v698
    %v700 = vpop.f32.mrf.mxu0
    %v701 = vpop.f32.mrf.mxu0
    %v702 = vadd.f32 %v534, %v701
    %v703 = vpop.f32.mrf.mxu0
    %704 = vmatprep.mubr.bf16.mxu0 0
    %705 = vmatmul.mubr.bf16.gmra.mxu0 %v512
    %v706 = vpop.f32.mrf.mxu0
    %v707 = vadd.f32 %v534, %v706
    %v708 = vpop.f32.mrf.mxu0
    %v709 = vpop.f32.mrf.mxu0
    %v710 = vadd.f32 %v534, %v709
    %v711 = vpop.f32.mrf.mxu0
    %712 = vdwg.mxu0
    %v713 = vadd.f32 %v44, %v619
    %v714 = vadd.f32 %v45, %v622
    %v715 = vadd.f32 %v46, %v627
    %v716 = vadd.f32 %v47, %v630
    %v717 = vadd.f32 %v48, %v635
    %v718 = vadd.f32 %v49, %v638
    %v719 = vadd.f32 %v50, %v643
    %v720 = vadd.f32 %v51, %v646
    %v721 = vadd.f32 %v52, %v651
    %v722 = vadd.f32 %v53, %v654
    %v723 = vadd.f32 %v54, %v659
    %v724 = vadd.f32 %v55, %v662
    %v725 = vadd.f32 %v56, %v667
    %v726 = vadd.f32 %v57, %v670
    %v727 = vadd.f32 %v58, %v675
    %v728 = vadd.f32 %v59, %v678
    %v729 = vadd.f32 %v60, %v683
    %v730 = vadd.f32 %v61, %v686
    %v731 = vadd.f32 %v62, %v691
    %v732 = vadd.f32 %v63, %v694
    %v733 = vadd.f32 %v64, %v699
    %v734 = vadd.f32 %v65, %v702
    %v735 = vadd.f32 %v66, %v707
    %v736 = vadd.f32 %v67, %v710
    %737 = vst [vmem:[#allocation7] sm:$0xff] %v713
    %738 = vst [vmem:[#allocation7 + $0x8] sm:$0xff] %v714
    %739 = vst [vmem:[#allocation7 + $0x10] sm:$0xff] %v715
    %740 = vst [vmem:[#allocation7 + $0x18] sm:$0xff] %v716
    %741 = vst [vmem:[#allocation7 + $0x20] sm:$0xff] %v717
    %742 = vst [vmem:[#allocation7 + $0x28] sm:$0xff] %v718
    %743 = vst [vmem:[#allocation7 + $0x30] sm:$0xff] %v719
    %744 = vst [vmem:[#allocation7 + $0x38] sm:$0xff] %v720
    %745 = vst [vmem:[#allocation7 + $0x40] sm:$0xff] %v721
    %746 = vst [vmem:[#allocation7 + $0x48] sm:$0xff] %v722
    %747 = vst [vmem:[#allocation7 + $0x50] sm:$0xff] %v723
    %748 = vst [vmem:[#allocation7 + $0x58] sm:$0xff] %v724
    %749 = vst [vmem:[#allocation7 + $0x60] sm:$0xff] %v725
    %750 = vst [vmem:[#allocation7 + $0x68] sm:$0xff] %v726
    %751 = vst [vmem:[#allocation7 + $0x70] sm:$0xff] %v727
    %752 = vst [vmem:[#allocation7 + $0x78] sm:$0xff] %v728
    %753 = vst [vmem:[#allocation7 + $0x80] sm:$0xff] %v729
    %754 = vst [vmem:[#allocation7 + $0x88] sm:$0xff] %v730
    %755 = vst [vmem:[#allocation7 + $0x90] sm:$0xff] %v731
    %756 = vst [vmem:[#allocation7 + $0x98] sm:$0xff] %v732
    %757 = vst [vmem:[#allocation7 + $0xa0] sm:$0xff] %v733
    %758 = vst [vmem:[#allocation7 + $0xa8] sm:$0xff] %v734
    %759 = vst [vmem:[#allocation7 + $0xb0] sm:$0xff] %v735
    %760 = vst [vmem:[#allocation7 + $0xb8] sm:$0xff] %v736
    // Predicated region
    $region22: #{tpu_custom_call.1} parent=1 // pred_check
      _
    $region23: #{tpu_custom_call.1} parent=1 // pred_check_branch
      %762 = sbr.rel (0) target = $region25
    $region24: #{tpu_custom_call.1} parent=1 // pred_region
      %s764 = ssub.s32 3072, 3072
      %765 = vsyncadd [#allocation4], %s764
      %s766 = sshll.u32 [#allocation7], 4
      %s767 = int_to_ptr.vmem [resolvable:$true] %s766
      %772 = dma.vmem_to_hbm [thread:$0]  %s767, 3072, %s3, [#allocation4], 128, 128, 8
    $region25: #{tpu_custom_call.1} parent=1 // pred_fallthru
      _
    // Predicated region
    $region26: #{tpu_custom_call.1} parent=1 // pred_check
      _
    $region27: #{tpu_custom_call.1} parent=1 // pred_check_branch
      %774 = sbr.rel (0) target = $region29
    $region28: #{tpu_custom_call.1} parent=1 // pred_region
      %775 = dma.done [#allocation4], 3072
    $region29: #{tpu_custom_call.1} parent=1 // pred_fallthru
      _
    %776 = vsyncpa [#allocation3], 1
    %777 = vsyncpa [#allocation6], 1
    %778 = vsyncpa [#allocation4], 1

// kernel: tpu_custom_call.1
$region0: #{tpu_custom_call.1}
  #allocation0 [shape = 'u32[]', space=smem, size = 0x4, offset = 0x4, fixed_abs, tag = 'smem constant byte address 0x4 - core index']
  #allocation1 [shape = 'u32[144,128]{1,0:T(1,128)}', space=vmem, size = 0x12000, scoped, tag = 'internal scratch']
  %s0 = inlined_call_operand.hbm [shape: f32[192,128], index: 0, kind: input, shape index: {}]
  %s1 = inlined_call_operand.hbm [shape: bf16[128,128], index: 1, kind: input, shape index: {}]
  %s2 = inlined_call_operand.vmem [shape: f32[1,128], index: 2, kind: input, shape index: {}]
  %s3 = inlined_call_operand.hbm [shape: f32[192,128], index: 3, kind: output, shape index: {}]
  %s4 = sld [smem:[#allocation0]]
  $region30: #{tpu_custom_call.1} parent=0
    _
  %s6 = ssub.s32 1, %s4
  %s7 = scalar_select 0, %s6, %s4
  $region1: #{tpu_custom_call.1} parent=0
    #allocation2 [shape = 'u8[98304]{0}', space=vmem, size = 0x18000, scoped, tag = 'input window, operand 0, single buffered']
    #allocation3 [shape = 's32[1]{0}', space=sflag, size = 0x4, scoped, tag = 'scoped memory for tpu_custom_call.1']
    #allocation4 [shape = 's32[1]{0}', space=sflag, size = 0x4, scoped, tag = 'scoped memory for tpu_custom_call.1']
    #allocation5 [shape = 'u8[32768]{0}', space=vmem, size = 0x8000, scoped, tag = 'input window, operand 1, single buffered']
    #allocation6 [shape = 's32[1]{0}', space=sflag, size = 0x4, scoped, tag = 'scoped memory for tpu_custom_call.1']
    #allocation7 [shape = 'u8[98304]{0}', space=vmem, size = 0x18000, scoped, tag = 'output window, operand 0, single buffered']
    %8 = vsyncpa [#allocation3], 0
    %9 = vsyncpa [#allocation6], 0
    %10 = vsyncpa [#allocation4], 0
    // Predicated region
    $region2: #{tpu_custom_call.1} parent=1 // pred_check
      _
    $region3: #{tpu_custom_call.1} parent=1 // pred_check_branch
      %12 = sbr.rel (0) target = $region5
    $region4: #{tpu_custom_call.1} parent=1 // pred_region
      %s14 = ssub.s32 3072, 3072
      %15 = vsyncadd [#allocation3], %s14
      %s16 = sshll.u32 [#allocation2], 4
      %s17 = int_to_ptr.vmem [resolvable:$true] %s16
      %22 = dma.hbm_to_vmem [thread:$0]  %s0, 3072, %s17, [#allocation3], 128, 128, 8
    $region5: #{tpu_custom_call.1} parent=1 // pred_fallthru
      _
    // Predicated region
    $region6: #{tpu_custom_call.1} parent=1 // pred_check
      _
    $region7: #{tpu_custom_call.1} parent=1 // pred_check_branch
      %24 = sbr.rel (0) target = $region9
    $region8: #{tpu_custom_call.1} parent=1 // pred_region
      %s26 = ssub.s32 1024, 1024
      %27 = vsyncadd [#allocation6], %s26
      %s28 = sshll.u32 [#allocation5], 4
      %s29 = int_to_ptr.vmem [resolvable:$true] %s28
      %34 = dma.hbm_to_vmem [thread:$0]  %s1, 1024, %s29, [#allocation6], 64, 64, 4
    $region9: #{tpu_custom_call.1} parent=1 // pred_fallthru
      _
    // Predicated region
    $region10: #{tpu_custom_call.1} parent=1 // pred_check
      _
    $region11: #{tpu_custom_call.1} parent=1 // pred_check_branch
      %36 = sbr.rel (0) target = $region13
    $region12: #{tpu_custom_call.1} parent=1 // pred_region
      _
    $region13: #{tpu_custom_call.1} parent=1 // pred_fallthru
      _
    // Predicated region
    $region14: #{tpu_custom_call.1} parent=1 // pred_check
      _
    $region15: #{tpu_custom_call.1} parent=1 // pred_check_branch
      %38 = sbr.rel (0) target = $region17
    $region16: #{tpu_custom_call.1} parent=1 // pred_region
      %39 = dma.done [#allocation3], 3072
    $region17: #{tpu_custom_call.1} parent=1 // pred_fallthru
      _
    // Predicated region
    $region18: #{tpu_custom_call.1} parent=1 // pred_check
      _
    $region19: #{tpu_custom_call.1} parent=1 // pred_check_branch
      %41 = sbr.rel (0) target = $region21
    $region20: #{tpu_custom_call.1} parent=1 // pred_region
      %42 = dma.done [#allocation6], 1024
    $region21: #{tpu_custom_call.1} parent=1 // pred_fallthru
      _
    %v44 = vld [vmem:[#allocation2] sm:$0xff]
    %v45 = vld [vmem:[#allocation2 + $0x8] sm:$0xff]
    %v46 = vld [vmem:[#allocation2 + $0x10] sm:$0xff]
    %v47 = vld [vmem:[#allocation2 + $0x18] sm:$0xff]
    %v48 = vld [vmem:[#allocation2 + $0x20] sm:$0xff]
    %v49 = vld [vmem:[#allocation2 + $0x28] sm:$0xff]
    %v50 = vld [vmem:[#allocation2 + $0x30] sm:$0xff]
    %v51 = vld [vmem:[#allocation2 + $0x38] sm:$0xff]
    %v52 = vld [vmem:[#allocation2 + $0x40] sm:$0xff]
    %v53 = vld [vmem:[#allocation2 + $0x48] sm:$0xff]
    %v54 = vld [vmem:[#allocation2 + $0x50] sm:$0xff]
    %v55 = vld [vmem:[#allocation2 + $0x58] sm:$0xff]
    %v56 = vld [vmem:[#allocation2 + $0x60] sm:$0xff]
    %v57 = vld [vmem:[#allocation2 + $0x68] sm:$0xff]
    %v58 = vld [vmem:[#allocation2 + $0x70] sm:$0xff]
    %v59 = vld [vmem:[#allocation2 + $0x78] sm:$0xff]
    %v60 = vld [vmem:[#allocation2 + $0x80] sm:$0xff]
    %v61 = vld [vmem:[#allocation2 + $0x88] sm:$0xff]
    %v62 = vld [vmem:[#allocation2 + $0x90] sm:$0xff]
    %v63 = vld [vmem:[#allocation2 + $0x98] sm:$0xff]
    %v64 = vld [vmem:[#allocation2 + $0xa0] sm:$0xff]
    %v65 = vld [vmem:[#allocation2 + $0xa8] sm:$0xff]
    %v66 = vld [vmem:[#allocation2 + $0xb0] sm:$0xff]
    %v67 = vld [vmem:[#allocation2 + $0xb8] sm:$0xff]
    %68 = vadd.xlane.f32.xlu0 %v44
    %v69 = vpop.xlane.xlu0 %68
    %70 = vadd.xlane.f32.xlu0 %v45
    %v71 = vpop.xlane.xlu0 %70
    %72 = vadd.xlane.f32.xlu0 %v46
    %v73 = vpop.xlane.xlu0 %72
    %74 = vadd.xlane.f32.xlu0 %v47
    %v75 = vpop.xlane.xlu0 %74
    %76 = vadd.xlane.f32.xlu0 %v48
    %v77 = vpop.xlane.xlu0 %76
    %78 = vadd.xlane.f32.xlu0 %v49
    %v79 = vpop.xlane.xlu0 %78
    %80 = vadd.xlane.f32.xlu0 %v50
    %v81 = vpop.xlane.xlu0 %80
    %82 = vadd.xlane.f32.xlu0 %v51
    %v83 = vpop.xlane.xlu0 %82
    %84 = vadd.xlane.f32.xlu0 %v52
    %v85 = vpop.xlane.xlu0 %84
    %86 = vadd.xlane.f32.xlu0 %v53
    %v87 = vpop.xlane.xlu0 %86
    %88 = vadd.xlane.f32.xlu0 %v54
    %v89 = vpop.xlane.xlu0 %88
    %90 = vadd.xlane.f32.xlu0 %v55
    %v91 = vpop.xlane.xlu0 %90
    %92 = vadd.xlane.f32.xlu0 %v56
    %v93 = vpop.xlane.xlu0 %92
    %94 = vadd.xlane.f32.xlu0 %v57
    %v95 = vpop.xlane.xlu0 %94
    %96 = vadd.xlane.f32.xlu0 %v58
    %v97 = vpop.xlane.xlu0 %96
    %98 = vadd.xlane.f32.xlu0 %v59
    %v99 = vpop.xlane.xlu0 %98
    %100 = vadd.xlane.f32.xlu0 %v60
    %v101 = vpop.xlane.xlu0 %100
    %102 = vadd.xlane.f32.xlu0 %v61
    %v103 = vpop.xlane.xlu0 %102
    %104 = vadd.xlane.f32.xlu0 %v62
    %v105 = vpop.xlane.xlu0 %104
    %106 = vadd.xlane.f32.xlu0 %v63
    %v107 = vpop.xlane.xlu0 %106
    %108 = vadd.xlane.f32.xlu0 %v64
    %v109 = vpop.xlane.xlu0 %108
    %110 = vadd.xlane.f32.xlu0 %v65
    %v111 = vpop.xlane.xlu0 %110
    %112 = vadd.xlane.f32.xlu0 %v66
    %v113 = vpop.xlane.xlu0 %112
    %114 = vadd.xlane.f32.xlu0 %v67
    %v115 = vpop.xlane.xlu0 %114
    %v116 = vrcp.pop 128.0
    %v117 = vmul.f32 %v69, %v116
    %v118 = vmul.f32 %v71, %v116
    %v119 = vmul.f32 %v73, %v116
    %v120 = vmul.f32 %v75, %v116
    %v121 = vmul.f32 %v77, %v116
    %v122 = vmul.f32 %v79, %v116
    %v123 = vmul.f32 %v81, %v116
    %v124 = vmul.f32 %v83, %v116
    %v125 = vmul.f32 %v85, %v116
    %v126 = vmul.f32 %v87, %v116
    %v127 = vmul.f32 %v89, %v116
    %v128 = vmul.f32 %v91, %v116
    %v129 = vmul.f32 %v93, %v116
    %v130 = vmul.f32 %v95, %v116
    %v131 = vmul.f32 %v97, %v116
    %v132 = vmul.f32 %v99, %v116
    %v133 = vmul.f32 %v101, %v116
    %v134 = vmul.f32 %v103, %v116
    %v135 = vmul.f32 %v105, %v116
    %v136 = vmul.f32 %v107, %v116
    %v137 = vmul.f32 %v109, %v116
    %v138 = vmul.f32 %v111, %v116
    %v139 = vmul.f32 %v113, %v116
    %v140 = vmul.f32 %v115, %v116
    %v141 = vsub.f32 %v44, %v117
    %v142 = vsub.f32 %v45, %v118
    %v143 = vsub.f32 %v46, %v119
    %v144 = vsub.f32 %v47, %v120
    %v145 = vsub.f32 %v48, %v121
    %v146 = vsub.f32 %v49, %v122
    %v147 = vsub.f32 %v50, %v123
    %v148 = vsub.f32 %v51, %v124
    %v149 = vsub.f32 %v52, %v125
    %v150 = vsub.f32 %v53, %v126
    %v151 = vsub.f32 %v54, %v127
    %v152 = vsub.f32 %v55, %v128
    %v153 = vsub.f32 %v56, %v129
    %v154 = vsub.f32 %v57, %v130
    %v155 = vsub.f32 %v58, %v131
    %v156 = vsub.f32 %v59, %v132
    %v157 = vsub.f32 %v60, %v133
    %v158 = vsub.f32 %v61, %v134
    %v159 = vsub.f32 %v62, %v135
    %v160 = vsub.f32 %v63, %v136
    %v161 = vsub.f32 %v64, %v137
    %v162 = vsub.f32 %v65, %v138
    %v163 = vsub.f32 %v66, %v139
    %v164 = vsub.f32 %v67, %v140
    %v165 = vmul.f32 %v141, %v141
    %v166 = vmul.f32 %v142, %v142
    %v167 = vmul.f32 %v143, %v143
    %v168 = vmul.f32 %v144, %v144
    %v169 = vmul.f32 %v145, %v145
    %v170 = vmul.f32 %v146, %v146
    %v171 = vmul.f32 %v147, %v147
    %v172 = vmul.f32 %v148, %v148
    %v173 = vmul.f32 %v149, %v149
    %v174 = vmul.f32 %v150, %v150
    %v175 = vmul.f32 %v151, %v151
    %v176 = vmul.f32 %v152, %v152
    %v177 = vmul.f32 %v153, %v153
    %v178 = vmul.f32 %v154, %v154
    %v179 = vmul.f32 %v155, %v155
    %v180 = vmul.f32 %v156, %v156
    %v181 = vmul.f32 %v157, %v157
    %v182 = vmul.f32 %v158, %v158
    %v183 = vmul.f32 %v159, %v159
    %v184 = vmul.f32 %v160, %v160
    %v185 = vmul.f32 %v161, %v161
    %v186 = vmul.f32 %v162, %v162
    %v187 = vmul.f32 %v163, %v163
    %v188 = vmul.f32 %v164, %v164
    %189 = vadd.xlane.f32.xlu0 %v165
    %v190 = vpop.xlane.xlu0 %189
    %191 = vadd.xlane.f32.xlu0 %v166
    %v192 = vpop.xlane.xlu0 %191
    %193 = vadd.xlane.f32.xlu0 %v167
    %v194 = vpop.xlane.xlu0 %193
    %195 = vadd.xlane.f32.xlu0 %v168
    %v196 = vpop.xlane.xlu0 %195
    %197 = vadd.xlane.f32.xlu0 %v169
    %v198 = vpop.xlane.xlu0 %197
    %199 = vadd.xlane.f32.xlu0 %v170
    %v200 = vpop.xlane.xlu0 %199
    %201 = vadd.xlane.f32.xlu0 %v171
    %v202 = vpop.xlane.xlu0 %201
    %203 = vadd.xlane.f32.xlu0 %v172
    %v204 = vpop.xlane.xlu0 %203
    %205 = vadd.xlane.f32.xlu0 %v173
    %v206 = vpop.xlane.xlu0 %205
    %207 = vadd.xlane.f32.xlu0 %v174
    %v208 = vpop.xlane.xlu0 %207
    %209 = vadd.xlane.f32.xlu0 %v175
    %v210 = vpop.xlane.xlu0 %209
    %211 = vadd.xlane.f32.xlu0 %v176
    %v212 = vpop.xlane.xlu0 %211
    %213 = vadd.xlane.f32.xlu0 %v177
    %v214 = vpop.xlane.xlu0 %213
    %215 = vadd.xlane.f32.xlu0 %v178
    %v216 = vpop.xlane.xlu0 %215
    %217 = vadd.xlane.f32.xlu0 %v179
    %v218 = vpop.xlane.xlu0 %217
    %219 = vadd.xlane.f32.xlu0 %v180
    %v220 = vpop.xlane.xlu0 %219
    %221 = vadd.xlane.f32.xlu0 %v181
    %v222 = vpop.xlane.xlu0 %221
    %223 = vadd.xlane.f32.xlu0 %v182
    %v224 = vpop.xlane.xlu0 %223
    %225 = vadd.xlane.f32.xlu0 %v183
    %v226 = vpop.xlane.xlu0 %225
    %227 = vadd.xlane.f32.xlu0 %v184
    %v228 = vpop.xlane.xlu0 %227
    %229 = vadd.xlane.f32.xlu0 %v185
    %v230 = vpop.xlane.xlu0 %229
    %231 = vadd.xlane.f32.xlu0 %v186
    %v232 = vpop.xlane.xlu0 %231
    %233 = vadd.xlane.f32.xlu0 %v187
    %v234 = vpop.xlane.xlu0 %233
    %235 = vadd.xlane.f32.xlu0 %v188
    %v236 = vpop.xlane.xlu0 %235
    %v237 = vmul.f32 %v190, 0.007874016
    %v238 = vmul.f32 %v192, 0.007874016
    %v239 = vmul.f32 %v194, 0.007874016
    %v240 = vmul.f32 %v196, 0.007874016
    %v241 = vmul.f32 %v198, 0.007874016
    %v242 = vmul.f32 %v200, 0.007874016
    %v243 = vmul.f32 %v202, 0.007874016
    %v244 = vmul.f32 %v204, 0.007874016
    %v245 = vmul.f32 %v206, 0.007874016
    %v246 = vmul.f32 %v208, 0.007874016
    %v247 = vmul.f32 %v210, 0.007874016
    %v248 = vmul.f32 %v212, 0.007874016
    %v249 = vmul.f32 %v214, 0.007874016
    %v250 = vmul.f32 %v216, 0.007874016
    %v251 = vmul.f32 %v218, 0.007874016
    %v252 = vmul.f32 %v220, 0.007874016
    %v253 = vmul.f32 %v222, 0.007874016
    %v254 = vmul.f32 %v224, 0.007874016
    %v255 = vmul.f32 %v226, 0.007874016
    %v256 = vmul.f32 %v228, 0.007874016
    %v257 = vmul.f32 %v230, 0.007874016
    %v258 = vmul.f32 %v232, 0.007874016
    %v259 = vmul.f32 %v234, 0.007874016
    %v260 = vmul.f32 %v236, 0.007874016
    %v261 = vrsqrt.pop %v237
    %v262 = vmul.f32 %v237, %v261
    %vm263 = vcmp.eq.f32.partialorder %v237, inf
    %v264 = vsel %vm263, %v237, %v262
    %vm265 = vcmp.eq.f32.partialorder %v237, 0.0
    %v266 = vand.u32 %v237, 2147483648
    %v267 = vsel %vm265, %v266, %v264
    %v268 = vrsqrt.pop %v238
    %v269 = vmul.f32 %v238, %v268
    %vm270 = vcmp.eq.f32.partialorder %v238, inf
    %v271 = vsel %vm270, %v238, %v269
    %vm272 = vcmp.eq.f32.partialorder %v238, 0.0
    %v273 = vand.u32 %v238, 2147483648
    %v274 = vsel %vm272, %v273, %v271
    %v275 = vrsqrt.pop %v239
    %v276 = vmul.f32 %v239, %v275
    %vm277 = vcmp.eq.f32.partialorder %v239, inf
    %v278 = vsel %vm277, %v239, %v276
    %vm279 = vcmp.eq.f32.partialorder %v239, 0.0
    %v280 = vand.u32 %v239, 2147483648
    %v281 = vsel %vm279, %v280, %v278
    %v282 = vrsqrt.pop %v240
    %v283 = vmul.f32 %v240, %v282
    %vm284 = vcmp.eq.f32.partialorder %v240, inf
    %v285 = vsel %vm284, %v240, %v283
    %vm286 = vcmp.eq.f32.partialorder %v240, 0.0
    %v287 = vand.u32 %v240, 2147483648
    %v288 = vsel %vm286, %v287, %v285
    %v289 = vrsqrt.pop %v241
    %v290 = vmul.f32 %v241, %v289
    %vm291 = vcmp.eq.f32.partialorder %v241, inf
    %v292 = vsel %vm291, %v241, %v290
    %vm293 = vcmp.eq.f32.partialorder %v241, 0.0
    %v294 = vand.u32 %v241, 2147483648
    %v295 = vsel %vm293, %v294, %v292
    %v296 = vrsqrt.pop %v242
    %v297 = vmul.f32 %v242, %v296
    %vm298 = vcmp.eq.f32.partialorder %v242, inf
    %v299 = vsel %vm298, %v242, %v297
    %vm300 = vcmp.eq.f32.partialorder %v242, 0.0
    %v301 = vand.u32 %v242, 2147483648
    %v302 = vsel %vm300, %v301, %v299
    %v303 = vrsqrt.pop %v243
    %v304 = vmul.f32 %v243, %v303
    %vm305 = vcmp.eq.f32.partialorder %v243, inf
    %v306 = vsel %vm305, %v243, %v304
    %vm307 = vcmp.eq.f32.partialorder %v243, 0.0
    %v308 = vand.u32 %v243, 2147483648
    %v309 = vsel %vm307, %v308, %v306
    %v310 = vrsqrt.pop %v244
    %v311 = vmul.f32 %v244, %v310
    %vm312 = vcmp.eq.f32.partialorder %v244, inf
    %v313 = vsel %vm312, %v244, %v311
    %vm314 = vcmp.eq.f32.partialorder %v244, 0.0
    %v315 = vand.u32 %v244, 2147483648
    %v316 = vsel %vm314, %v315, %v313
    %v317 = vrsqrt.pop %v245
    %v318 = vmul.f32 %v245, %v317
    %vm319 = vcmp.eq.f32.partialorder %v245, inf
    %v320 = vsel %vm319, %v245, %v318
    %vm321 = vcmp.eq.f32.partialorder %v245, 0.0
    %v322 = vand.u32 %v245, 2147483648
    %v323 = vsel %vm321, %v322, %v320
    %v324 = vrsqrt.pop %v246
    %v325 = vmul.f32 %v246, %v324
    %vm326 = vcmp.eq.f32.partialorder %v246, inf
    %v327 = vsel %vm326, %v246, %v325
    %vm328 = vcmp.eq.f32.partialorder %v246, 0.0
    %v329 = vand.u32 %v246, 2147483648
    %v330 = vsel %vm328, %v329, %v327
    %v331 = vrsqrt.pop %v247
    %v332 = vmul.f32 %v247, %v331
    %vm333 = vcmp.eq.f32.partialorder %v247, inf
    %v334 = vsel %vm333, %v247, %v332
    %vm335 = vcmp.eq.f32.partialorder %v247, 0.0
    %v336 = vand.u32 %v247, 2147483648
    %v337 = vsel %vm335, %v336, %v334
    %v338 = vrsqrt.pop %v248
    %v339 = vmul.f32 %v248, %v338
    %vm340 = vcmp.eq.f32.partialorder %v248, inf
    %v341 = vsel %vm340, %v248, %v339
    %vm342 = vcmp.eq.f32.partialorder %v248, 0.0
    %v343 = vand.u32 %v248, 2147483648
    %v344 = vsel %vm342, %v343, %v341
    %v345 = vrsqrt.pop %v249
    %v346 = vmul.f32 %v249, %v345
    %vm347 = vcmp.eq.f32.partialorder %v249, inf
    %v348 = vsel %vm347, %v249, %v346
    %vm349 = vcmp.eq.f32.partialorder %v249, 0.0
    %v350 = vand.u32 %v249, 2147483648
    %v351 = vsel %vm349, %v350, %v348
    %v352 = vrsqrt.pop %v250
    %v353 = vmul.f32 %v250, %v352
    %vm354 = vcmp.eq.f32.partialorder %v250, inf
    %v355 = vsel %vm354, %v250, %v353
    %vm356 = vcmp.eq.f32.partialorder %v250, 0.0
    %v357 = vand.u32 %v250, 2147483648
    %v358 = vsel %vm356, %v357, %v355
    %v359 = vrsqrt.pop %v251
    %v360 = vmul.f32 %v251, %v359
    %vm361 = vcmp.eq.f32.partialorder %v251, inf
    %v362 = vsel %vm361, %v251, %v360
    %vm363 = vcmp.eq.f32.partialorder %v251, 0.0
    %v364 = vand.u32 %v251, 2147483648
    %v365 = vsel %vm363, %v364, %v362
    %v366 = vrsqrt.pop %v252
    %v367 = vmul.f32 %v252, %v366
    %vm368 = vcmp.eq.f32.partialorder %v252, inf
    %v369 = vsel %vm368, %v252, %v367
    %vm370 = vcmp.eq.f32.partialorder %v252, 0.0
    %v371 = vand.u32 %v252, 2147483648
    %v372 = vsel %vm370, %v371, %v369
    %v373 = vrsqrt.pop %v253
    %v374 = vmul.f32 %v253, %v373
    %vm375 = vcmp.eq.f32.partialorder %v253, inf
    %v376 = vsel %vm375, %v253, %v374
    %vm377 = vcmp.eq.f32.partialorder %v253, 0.0
    %v378 = vand.u32 %v253, 2147483648
    %v379 = vsel %vm377, %v378, %v376
    %v380 = vrsqrt.pop %v254
    %v381 = vmul.f32 %v254, %v380
    %vm382 = vcmp.eq.f32.partialorder %v254, inf
    %v383 = vsel %vm382, %v254, %v381
    %vm384 = vcmp.eq.f32.partialorder %v254, 0.0
    %v385 = vand.u32 %v254, 2147483648
    %v386 = vsel %vm384, %v385, %v383
    %v387 = vrsqrt.pop %v255
    %v388 = vmul.f32 %v255, %v387
    %vm389 = vcmp.eq.f32.partialorder %v255, inf
    %v390 = vsel %vm389, %v255, %v388
    %vm391 = vcmp.eq.f32.partialorder %v255, 0.0
    %v392 = vand.u32 %v255, 2147483648
    %v393 = vsel %vm391, %v392, %v390
    %v394 = vrsqrt.pop %v256
    %v395 = vmul.f32 %v256, %v394
    %vm396 = vcmp.eq.f32.partialorder %v256, inf
    %v397 = vsel %vm396, %v256, %v395
    %vm398 = vcmp.eq.f32.partialorder %v256, 0.0
    %v399 = vand.u32 %v256, 2147483648
    %v400 = vsel %vm398, %v399, %v397
    %v401 = vrsqrt.pop %v257
    %v402 = vmul.f32 %v257, %v401
    %vm403 = vcmp.eq.f32.partialorder %v257, inf
    %v404 = vsel %vm403, %v257, %v402
    %vm405 = vcmp.eq.f32.partialorder %v257, 0.0
    %v406 = vand.u32 %v257, 2147483648
    %v407 = vsel %vm405, %v406, %v404
    %v408 = vrsqrt.pop %v258
    %v409 = vmul.f32 %v258, %v408
    %vm410 = vcmp.eq.f32.partialorder %v258, inf
    %v411 = vsel %vm410, %v258, %v409
    %vm412 = vcmp.eq.f32.partialorder %v258, 0.0
    %v413 = vand.u32 %v258, 2147483648
    %v414 = vsel %vm412, %v413, %v411
    %v415 = vrsqrt.pop %v259
    %v416 = vmul.f32 %v259, %v415
    %vm417 = vcmp.eq.f32.partialorder %v259, inf
    %v418 = vsel %vm417, %v259, %v416
    %vm419 = vcmp.eq.f32.partialorder %v259, 0.0
    %v420 = vand.u32 %v259, 2147483648
    %v421 = vsel %vm419, %v420, %v418
    %v422 = vrsqrt.pop %v260
    %v423 = vmul.f32 %v260, %v422
    %vm424 = vcmp.eq.f32.partialorder %v260, inf
    %v425 = vsel %vm424, %v260, %v423
    %vm426 = vcmp.eq.f32.partialorder %v260, 0.0
    %v427 = vand.u32 %v260, 2147483648
    %v428 = vsel %vm426, %v427, %v425
    %v429 = vadd.f32 %v267, 1e-06
    %v430 = vadd.f32 %v274, 1e-06
    %v431 = vadd.f32 %v281, 1e-06
    %v432 = vadd.f32 %v288, 1e-06
    %v433 = vadd.f32 %v295, 1e-06
    %v434 = vadd.f32 %v302, 1e-06
    %v435 = vadd.f32 %v309, 1e-06
    %v436 = vadd.f32 %v316, 1e-06
    %v437 = vadd.f32 %v323, 1e-06
    %v438 = vadd.f32 %v330, 1e-06
    %v439 = vadd.f32 %v337, 1e-06
    %v440 = vadd.f32 %v344, 1e-06
    %v441 = vadd.f32 %v351, 1e-06
    %v442 = vadd.f32 %v358, 1e-06
    %v443 = vadd.f32 %v365, 1e-06
    %v444 = vadd.f32 %v372, 1e-06
    %v445 = vadd.f32 %v379, 1e-06
    %v446 = vadd.f32 %v386, 1e-06
    %v447 = vadd.f32 %v393, 1e-06
    %v448 = vadd.f32 %v400, 1e-06
    %v449 = vadd.f32 %v407, 1e-06
    %v450 = vadd.f32 %v414, 1e-06
    %v451 = vadd.f32 %v421, 1e-06
    %v452 = vadd.f32 %v428, 1e-06
    %v453 = vrcp.pop %v429
    %v454 = vrcp.pop %v430
    %v455 = vrcp.pop %v431
    %v456 = vrcp.pop %v432
    %v457 = vrcp.pop %v433
    %v458 = vrcp.pop %v434
    %v459 = vrcp.pop %v435
    %v460 = vrcp.pop %v436
    %v461 = vrcp.pop %v437
    %v462 = vrcp.pop %v438
    %v463 = vrcp.pop %v439
    %v464 = vrcp.pop %v440
    %v465 = vrcp.pop %v441
    %v466 = vrcp.pop %v442
    %v467 = vrcp.pop %v443
    %v468 = vrcp.pop %v444
    %v469 = vrcp.pop %v445
    %v470 = vrcp.pop %v446
    %v471 = vrcp.pop %v447
    %v472 = vrcp.pop %v448
    %v473 = vrcp.pop %v449
    %v474 = vrcp.pop %v450
    %v475 = vrcp.pop %v451
    %v476 = vrcp.pop %v452
    %v477 = vmul.f32 %v141, %v453
    %v478 = vmul.f32 %v142, %v454
    %v479 = vmul.f32 %v143, %v455
    %v480 = vmul.f32 %v144, %v456
    %v481 = vmul.f32 %v145, %v457
    %v482 = vmul.f32 %v146, %v458
    %v483 = vmul.f32 %v147, %v459
    %v484 = vmul.f32 %v148, %v460
    %v485 = vmul.f32 %v149, %v461
    %v486 = vmul.f32 %v150, %v462
    %v487 = vmul.f32 %v151, %v463
    %v488 = vmul.f32 %v152, %v464
    %v489 = vmul.f32 %v153, %v465
    %v490 = vmul.f32 %v154, %v466
    %v491 = vmul.f32 %v155, %v467
    %v492 = vmul.f32 %v156, %v468
    %v493 = vmul.f32 %v157, %v469
    %v494 = vmul.f32 %v158, %v470
    %v495 = vmul.f32 %v159, %v471
    %v496 = vmul.f32 %v160, %v472
    %v497 = vmul.f32 %v161, %v473
    %v498 = vmul.f32 %v162, %v474
    %v499 = vmul.f32 %v163, %v475
    %v500 = vmul.f32 %v164, %v476
    %v501 = vpack.c.bf16 %v478, %v477
    %v502 = vpack.c.bf16 %v480, %v479
    %v503 = vpack.c.bf16 %v482, %v481
    %v504 = vpack.c.bf16 %v484, %v483
    %v505 = vpack.c.bf16 %v486, %v485
    %v506 = vpack.c.bf16 %v488, %v487
    %v507 = vpack.c.bf16 %v490, %v489
    %v508 = vpack.c.bf16 %v492, %v491
    %v509 = vpack.c.bf16 %v494, %v493
    %v510 = vpack.c.bf16 %v496, %v495
    %v511 = vpack.c.bf16 %v498, %v497
    %v512 = vpack.c.bf16 %v500, %v499
    %v513 = vld [vmem:[#allocation5] sm:$0xf]
    %v514 = vld [vmem:[#allocation5 + $0x4] sm:$0xf]
    %v515 = vld [vmem:[#allocation5 + $0x8] sm:$0xf]
    %v516 = vld [vmem:[#allocation5 + $0xc] sm:$0xf]
    %v517 = vld [vmem:[#allocation5 + $0x10] sm:$0xf]
    %v518 = vld [vmem:[#allocation5 + $0x14] sm:$0xf]
    %v519 = vld [vmem:[#allocation5 + $0x18] sm:$0xf]
    %v520 = vld [vmem:[#allocation5 + $0x1c] sm:$0xf]
    %v521 = vld [vmem:[#allocation5 + $0x20] sm:$0xf]
    %v522 = vld [vmem:[#allocation5 + $0x24] sm:$0xf]
    %v523 = vld [vmem:[#allocation5 + $0x28] sm:$0xf]
    %v524 = vld [vmem:[#allocation5 + $0x2c] sm:$0xf]
    %v525 = vld [vmem:[#allocation5 + $0x30] sm:$0xf]
    %v526 = vld [vmem:[#allocation5 + $0x34] sm:$0xf]
    %v527 = vld [vmem:[#allocation5 + $0x38] sm:$0xf]
    %v528 = vld [vmem:[#allocation5 + $0x3c] sm:$0xf]
    %v529 = vld [vmem:[%s2] sm:$0x1]
    %v531 = vlaneseq
    %v532 = vshrl.u32 %v531, 7
    %v533 = vsub.s32 0, %v532
    %v534 = vrot.slane %v529, %v533
    %v552 = vunpack.c.l.b16 %v513
    %v553 = vunpack.c.l.b16 %v514
    %v554 = vunpack.c.l.b16 %v515
    %v555 = vunpack.c.l.b16 %v516
    %v556 = vunpack.c.l.b16 %v517
    %v557 = vunpack.c.l.b16 %v518
    %v558 = vunpack.c.l.b16 %v519
    %v559 = vunpack.c.l.b16 %v520
    %v560 = vunpack.c.l.b16 %v521
    %v561 = vunpack.c.l.b16 %v522
    %v562 = vunpack.c.l.b16 %v523
    %v563 = vunpack.c.l.b16 %v524
    %v564 = vunpack.c.l.b16 %v525
    %v565 = vunpack.c.l.b16 %v526
    %v566 = vunpack.c.l.b16 %v527
    %v567 = vunpack.c.l.b16 %v528
    %v568 = vpack.c.b16 %v553, %v552
    %v569 = vpack.c.b16 %v555, %v554
    %v570 = vpack.c.b16 %v557, %v556
    %v571 = vpack.c.b16 %v559, %v558
    %v572 = vpack.c.b16 %v561, %v560
    %v573 = vpack.c.b16 %v563, %v562
    %v574 = vpack.c.b16 %v565, %v564
    %v575 = vpack.c.b16 %v567, %v566
    %584 = vmatprep.subr.bf16.mxu0 0
    %585 = vmatpush1.bf16.msra.mxu0 %v575
    %586 = vmatprep.subr.bf16.mxu0 0
    %587 = vmatpush1.bf16.msra.mxu0 %v574
    %588 = vmatprep.subr.bf16.mxu0 0
    %589 = vmatpush1.bf16.msra.mxu0 %v573
    %590 = vmatprep.subr.bf16.mxu0 0
    %591 = vmatpush1.bf16.msra.mxu0 %v572
    %592 = vmatprep.subr.bf16.mxu0 0
    %593 = vmatpush1.bf16.msra.mxu0 %v571
    %594 = vmatprep.subr.bf16.mxu0 0
    %595 = vmatpush1.bf16.msra.mxu0 %v570
    %596 = vmatprep.subr.bf16.mxu0 0
    %597 = vmatpush1.bf16.msra.mxu0 %v569
    %598 = vmatprep.subr.bf16.mxu0 0
    %599 = vmatpush1.bf16.msra.mxu0 %v568
    %600 = vmatprep.subr.bf16.mxu0 0
    %601 = vmatpush2.bf16.msra.mxu0 0
    %602 = vmatprep.subr.bf16.mxu0 0
    %603 = vmatpush2.bf16.msra.mxu0 0
    %604 = vmatprep.subr.bf16.mxu0 0
    %605 = vmatpush2.bf16.msra.mxu0 0
    %606 = vmatprep.subr.bf16.mxu0 0
    %607 = vmatpush2.bf16.msra.mxu0 0
    %608 = vmatprep.subr.bf16.mxu0 0
    %609 = vmatpush2.bf16.msra.mxu0 0
    %610 = vmatprep.subr.bf16.mxu0 0
    %611 = vmatpush2.bf16.msra.mxu0 0
    %612 = vmatprep.subr.bf16.mxu0 0
    %613 = vmatpush2.bf16.msra.mxu0 0
    %614 = vmatprep.subr.bf16.mxu0 0
    %615 = vmatpush2.bf16.msra.mxu0 0
    %616 = vmatprep.mubr.bf16.mxu0 0
    %617 = vmatmul.mubr.bf16.gmra.mxu0 %v501
    %v618 = vpop.f32.mrf.mxu0
    %v619 = vadd.f32 %v534, %v618
    %v620 = vpop.f32.mrf.mxu0
    %v621 = vpop.f32.mrf.mxu0
    %v622 = vadd.f32 %v534, %v621
    %v623 = vpop.f32.mrf.mxu0
    %624 = vmatprep.mubr.bf16.mxu0 0
    %625 = vmatmul.mubr.bf16.gmra.mxu0 %v502
    %v626 = vpop.f32.mrf.mxu0
    %v627 = vadd.f32 %v534, %v626
    %v628 = vpop.f32.mrf.mxu0
    %v629 = vpop.f32.mrf.mxu0
    %v630 = vadd.f32 %v534, %v629
    %v631 = vpop.f32.mrf.mxu0
    %632 = vmatprep.mubr.bf16.mxu0 0
    %633 = vmatmul.mubr.bf16.gmra.mxu0 %v503
    %v634 = vpop.f32.mrf.mxu0
    %v635 = vadd.f32 %v534, %v634
    %v636 = vpop.f32.mrf.mxu0
    %v637 = vpop.f32.mrf.mxu0
    %v638 = vadd.f32 %v534, %v637
    %v639 = vpop.f32.mrf.mxu0
    %640 = vmatprep.mubr.bf16.mxu0 0
    %641 = vmatmul.mubr.bf16.gmra.mxu0 %v504
    %v642 = vpop.f32.mrf.mxu0
    %v643 = vadd.f32 %v534, %v642
    %v644 = vpop.f32.mrf.mxu0
    %v645 = vpop.f32.mrf.mxu0
    %v646 = vadd.f32 %v534, %v645
    %v647 = vpop.f32.mrf.mxu0
    %648 = vmatprep.mubr.bf16.mxu0 0
    %649 = vmatmul.mubr.bf16.gmra.mxu0 %v505
    %v650 = vpop.f32.mrf.mxu0
    %v651 = vadd.f32 %v534, %v650
    %v652 = vpop.f32.mrf.mxu0
    %v653 = vpop.f32.mrf.mxu0
    %v654 = vadd.f32 %v534, %v653
    %v655 = vpop.f32.mrf.mxu0
    %656 = vmatprep.mubr.bf16.mxu0 0
    %657 = vmatmul.mubr.bf16.gmra.mxu0 %v506
    %v658 = vpop.f32.mrf.mxu0
    %v659 = vadd.f32 %v534, %v658
    %v660 = vpop.f32.mrf.mxu0
    %v661 = vpop.f32.mrf.mxu0
    %v662 = vadd.f32 %v534, %v661
    %v663 = vpop.f32.mrf.mxu0
    %664 = vmatprep.mubr.bf16.mxu0 0
    %665 = vmatmul.mubr.bf16.gmra.mxu0 %v507
    %v666 = vpop.f32.mrf.mxu0
    %v667 = vadd.f32 %v534, %v666
    %v668 = vpop.f32.mrf.mxu0
    %v669 = vpop.f32.mrf.mxu0
    %v670 = vadd.f32 %v534, %v669
    %v671 = vpop.f32.mrf.mxu0
    %672 = vmatprep.mubr.bf16.mxu0 0
    %673 = vmatmul.mubr.bf16.gmra.mxu0 %v508
    %v674 = vpop.f32.mrf.mxu0
    %v675 = vadd.f32 %v534, %v674
    %v676 = vpop.f32.mrf.mxu0
    %v677 = vpop.f32.mrf.mxu0
    %v678 = vadd.f32 %v534, %v677
    %v679 = vpop.f32.mrf.mxu0
    %680 = vmatprep.mubr.bf16.mxu0 0
    %681 = vmatmul.mubr.bf16.gmra.mxu0 %v509
    %v682 = vpop.f32.mrf.mxu0
    %v683 = vadd.f32 %v534, %v682
    %v684 = vpop.f32.mrf.mxu0
    %v685 = vpop.f32.mrf.mxu0
    %v686 = vadd.f32 %v534, %v685
    %v687 = vpop.f32.mrf.mxu0
    %688 = vmatprep.mubr.bf16.mxu0 0
    %689 = vmatmul.mubr.bf16.gmra.mxu0 %v510
    %v690 = vpop.f32.mrf.mxu0
    %v691 = vadd.f32 %v534, %v690
    %v692 = vpop.f32.mrf.mxu0
    %v693 = vpop.f32.mrf.mxu0
    %v694 = vadd.f32 %v534, %v693
    %v695 = vpop.f32.mrf.mxu0
    %696 = vmatprep.mubr.bf16.mxu0 0
    %697 = vmatmul.mubr.bf16.gmra.mxu0 %v511
    %v698 = vpop.f32.mrf.mxu0
    %v699 = vadd.f32 %v534, %v698
    %v700 = vpop.f32.mrf.mxu0
    %v701 = vpop.f32.mrf.mxu0
    %v702 = vadd.f32 %v534, %v701
    %v703 = vpop.f32.mrf.mxu0
    %704 = vmatprep.mubr.bf16.mxu0 0
    %705 = vmatmul.mubr.bf16.gmra.mxu0 %v512
    %v706 = vpop.f32.mrf.mxu0
    %v707 = vadd.f32 %v534, %v706
    %v708 = vpop.f32.mrf.mxu0
    %v709 = vpop.f32.mrf.mxu0
    %v710 = vadd.f32 %v534, %v709
    %v711 = vpop.f32.mrf.mxu0
    %712 = vdwg.mxu0
    %v713 = vadd.f32 %v44, %v619
    %v714 = vadd.f32 %v45, %v622
    %v715 = vadd.f32 %v46, %v627
    %v716 = vadd.f32 %v47, %v630
    %v717 = vadd.f32 %v48, %v635
    %v718 = vadd.f32 %v49, %v638
    %v719 = vadd.f32 %v50, %v643
    %v720 = vadd.f32 %v51, %v646
    %v721 = vadd.f32 %v52, %v651
    %v722 = vadd.f32 %v53, %v654
    %v723 = vadd.f32 %v54, %v659
    %v724 = vadd.f32 %v55, %v662
    %v725 = vadd.f32 %v56, %v667
    %v726 = vadd.f32 %v57, %v670
    %v727 = vadd.f32 %v58, %v675
    %v728 = vadd.f32 %v59, %v678
    %v729 = vadd.f32 %v60, %v683
    %v730 = vadd.f32 %v61, %v686
    %v731 = vadd.f32 %v62, %v691
    %v732 = vadd.f32 %v63, %v694
    %v733 = vadd.f32 %v64, %v699
    %v734 = vadd.f32 %v65, %v702
    %v735 = vadd.f32 %v66, %v707
    %v736 = vadd.f32 %v67, %v710
    %737 = vst [vmem:[#allocation7] sm:$0xff] %v713
    %738 = vst [vmem:[#allocation7 + $0x8] sm:$0xff] %v714
    %739 = vst [vmem:[#allocation7 + $0x10] sm:$0xff] %v715
    %740 = vst [vmem:[#allocation7 + $0x18] sm:$0xff] %v716
    %741 = vst [vmem:[#allocation7 + $0x20] sm:$0xff] %v717
    %742 = vst [vmem:[#allocation7 + $0x28] sm:$0xff] %v718
    %743 = vst [vmem:[#allocation7 + $0x30] sm:$0xff] %v719
    %744 = vst [vmem:[#allocation7 + $0x38] sm:$0xff] %v720
    %745 = vst [vmem:[#allocation7 + $0x40] sm:$0xff] %v721
    %746 = vst [vmem:[#allocation7 + $0x48] sm:$0xff] %v722
    %747 = vst [vmem:[#allocation7 + $0x50] sm:$0xff] %v723
    %748 = vst [vmem:[#allocation7 + $0x58] sm:$0xff] %v724
    %749 = vst [vmem:[#allocation7 + $0x60] sm:$0xff] %v725
    %750 = vst [vmem:[#allocation7 + $0x68] sm:$0xff] %v726
    %751 = vst [vmem:[#allocation7 + $0x70] sm:$0xff] %v727
    %752 = vst [vmem:[#allocation7 + $0x78] sm:$0xff] %v728
    %753 = vst [vmem:[#allocation7 + $0x80] sm:$0xff] %v729
    %754 = vst [vmem:[#allocation7 + $0x88] sm:$0xff] %v730
    %755 = vst [vmem:[#allocation7 + $0x90] sm:$0xff] %v731
    %756 = vst [vmem:[#allocation7 + $0x98] sm:$0xff] %v732
    %757 = vst [vmem:[#allocation7 + $0xa0] sm:$0xff] %v733
    %758 = vst [vmem:[#allocation7 + $0xa8] sm:$0xff] %v734
    %759 = vst [vmem:[#allocation7 + $0xb0] sm:$0xff] %v735
    %760 = vst [vmem:[#allocation7 + $0xb8] sm:$0xff] %v736
    // Predicated region
    $region22: #{tpu_custom_call.1} parent=1 // pred_check
      _
    $region23: #{tpu_custom_call.1} parent=1 // pred_check_branch
      %762 = sbr.rel (0) target = $region25
    $region24: #{tpu_custom_call.1} parent=1 // pred_region
      %s764 = ssub.s32 3072, 3072
      %765 = vsyncadd [#allocation4], %s764
      %s766 = sshll.u32 [#allocation7], 4
      %s767 = int_to_ptr.vmem [resolvable:$true] %s766
      %772 = dma.vmem_to_hbm [thread:$0]  %s767, 3072, %s3, [#allocation4], 128, 128, 8
    $region25: #{tpu_custom_call.1} parent=1 // pred_fallthru
      _
    // Predicated region
    $region26: #{tpu_custom_call.1} parent=1 // pred_check
      _
    $region27: #{tpu_custom_call.1} parent=1 // pred_check_branch
      %774 = sbr.rel (0) target = $region29
    $region28: #{tpu_custom_call.1} parent=1 // pred_region
      %775 = dma.done [#allocation4], 3072
    $region29: #{tpu_custom_call.1} parent=1 // pred_fallthru
      _
    %776 = vsyncpa [#allocation3], 1
    %777 = vsyncpa [#allocation6], 1
    %778 = vsyncpa [#allocation4], 1

</llo_original>
